<compile_context>
chip_gen: v7x
topology: tpu7x:2x2x1
jax: 0.10.0
libtpu: 0.0.40
codegen_flags: <defaults>
</compile_context>

<pallas_src>
import functools

import jax
import jax.numpy as jnp
from jax.experimental import pallas as pl
from jax.experimental.pallas import tpu as pltpu

NODES_PER_GRAPH = 82                      # hard-coded in the PyTorch module (82 * hidden_dim)
_VMEM_LIMIT = 32 * 1024 * 1024            # fits v5e/v6e (128 MiB) and v7x (64 MiB) comfortably


def _full_spec(shape):
    """BlockSpec for a grid-invariant operand (weight/bias): one full block."""
    zeros = (0,) * len(shape)
    return pl.BlockSpec(shape, lambda i: zeros)


# ----------------------------------------------------------------------------
# Kernel 1: 3 x (GraphConv + ReLU), Bg graphs per grid step.
# ----------------------------------------------------------------------------
def _gcn_kernel(a_ref, x_ref,
                w1_ref, b1_ref, w2_ref, b2_ref, w3_ref, b3_ref,
                h_ref):
    a = a_ref[...]                        # (Bg, 82, 82) normalized adjacency
    h = x_ref[...]                        # (Bg, 82, in_dim) node features
    bg = a.shape[0]

    def gcn_relu(h, w_ref, b_ref):
        # GraphConv: Ahat @ (h @ W) + b, batched over the Bg graphs of this
        # step.  W is broadcast to a batch dim so both einsums are the
        # (batch-0, batch-0) dot_general pattern that lowers directly to MXU
        # matmuls with M = 82 rows per graph; accumulation stays f32.
        w = jnp.broadcast_to(w_ref[...][None], (bg,) + tuple(w_ref.shape))
        xw = jnp.einsum("gni,gio->gno", h, w,
                        preferred_element_type=jnp.float32)
        agg = jnp.einsum("gnm,gmo->gno", a, xw.astype(a.dtype),
                         preferred_element_type=jnp.float32)
        return jnp.maximum(agg + b_ref[...][None], 0.0).astype(h.dtype)

    h = gcn_relu(h, w1_ref, b1_ref)
    h = gcn_relu(h, w2_ref, b2_ref)
    h = gcn_relu(h, w3_ref, b3_ref)       # (Bg, 82, hidden)
    h_ref[...] = h.astype(h_ref.dtype)


# ----------------------------------------------------------------------------
# Kernel 2: MLP head on the node-major flatten, Br graph-rows per grid step.
#   y   = relu(h_flat @ Wl1 + bl1)   -- ONE (Br, 82*hidden)@(82*hidden, fc) matmul
#   out = y @ Wl2 + bl2
# ----------------------------------------------------------------------------
def _mlp_head_kernel(h_ref, l1w_ref, l1b_ref, l2w_ref, l2b_ref, out_ref):
    y = jnp.dot(h_ref[...], l1w_ref[...],
                preferred_element_type=jnp.float32) + l1b_ref[...]
    y = jnp.maximum(y, 0.0)
    # TODO(synk): dropout is identity (eval mode); training-mode RNG masking
    #             is not modeled.
    out = jnp.dot(y.astype(l2w_ref.dtype), l2w_ref[...],
                  preferred_element_type=jnp.float32) + l2b_ref[...]
    out_ref[...] = out.astype(out_ref.dtype)


# ----------------------------------------------------------------------------
# Wrapper
# ----------------------------------------------------------------------------
def _graphs_per_step(n_graphs, target=8):
    """Graphs packed into one GCN grid step.

    Large enough to amortize the per-step pipeline overhead and give the MXU a
    real M dimension, small enough to keep >= 2 grid steps (v7x has two
    TensorCores fed through the "parallel" axis).  VMEM per step is only a few
    hundred KiB even at Bg=8, far under the 32 MiB scoped budget.
    """
    if n_graphs <= 1:
        return 1
    return max(1, min(target, (n_graphs + 1) // 2))


def classifier_pallas(a_blocks, node_feats, params, n_graphs):
    k = NODES_PER_GRAPH
    in_dim = node_feats.shape[-1]
    hidden = params["gc1_w"].shape[-1]
    fc_dim = params["l1_w"].shape[-1]
    n_classes = params["l2_w"].shape[-1]
    cdt = params["gc1_w"].dtype           # matmul-operand ("compute") dtype

    assert node_feats.shape[0] == n_graphs * k

    x = node_feats.astype(cdt).reshape(n_graphs, k, in_dim)
    a = a_blocks.astype(cdt)

    # ---- GCN stack: Bg graphs per grid step --------------------------------
    bg = _graphs_per_step(n_graphs)
    n_steps = -(-n_graphs // bg)
    n_pad = n_steps * bg
    if n_pad != n_graphs:                 # pad with empty graphs; sliced off below
        x = jnp.pad(x, ((0, n_pad - n_graphs), (0, 0), (0, 0)))
        a = jnp.pad(a, ((0, n_pad - n_graphs), (0, 0), (0, 0)))

    h = pl.pallas_call(
        _gcn_kernel,
        out_shape=jax.ShapeDtypeStruct((n_pad, k, hidden), cdt),
        grid=(n_steps,),
        in_specs=[
            pl.BlockSpec((bg, k, k), lambda i: (i, 0, 0)),        # per-graph Ahat
            pl.BlockSpec((bg, k, in_dim), lambda i: (i, 0, 0)),   # node features
            _full_spec((in_dim, hidden)), _full_spec((1, hidden)),
            _full_spec((hidden, hidden)), _full_spec((1, hidden)),
            _full_spec((hidden, hidden)), _full_spec((1, hidden)),
        ],
        out_specs=pl.BlockSpec((bg, k, hidden), lambda i: (i, 0, 0)),
        compiler_params=pltpu.CompilerParams(
            dimension_semantics=("parallel",),
            vmem_limit_bytes=_VMEM_LIMIT),
    )(a, x,
      params["gc1_w"], params["gc1_b"],
      params["gc2_w"], params["gc2_b"],
      params["gc3_w"], params["gc3_b"])

    # Node-major flatten (== torch `h.view(n, -1)`), done as a plain XLA
    # reshape between the two kernels instead of an in-kernel sublane->lane
    # relayout.  Cost: ~82*hidden elements/graph of HBM traffic.
    h_flat = h.reshape(n_pad, k * hidden)

    # ---- MLP head: Br graph-rows per grid step ------------------------------
    if n_pad >= 8:
        br = 8                            # sublane-aligned row blocks
        n_rows = -(-n_pad // br) * br
        if n_rows != n_pad:
            h_flat = jnp.pad(h_flat, ((0, n_rows - n_pad), (0, 0)))
    else:
        br = n_pad                        # single full block for tiny batches
        n_rows = n_pad

    out = pl.pallas_call(
        _mlp_head_kernel,
        out_shape=jax.ShapeDtypeStruct((n_rows, n_classes), jnp.float32),
        grid=(n_rows // br,),
        in_specs=[
            pl.BlockSpec((br, k * hidden), lambda i: (i, 0)),
            _full_spec((k * hidden, fc_dim)), _full_spec((1, fc_dim)),
            _full_spec((fc_dim, n_classes)), _full_spec((1, n_classes)),
        ],
        out_specs=pl.BlockSpec((br, n_classes), lambda i: (i, 0)),
        compiler_params=pltpu.CompilerParams(
            dimension_semantics=("parallel",),
            vmem_limit_bytes=_VMEM_LIMIT),
    )(h_flat,
      params["l1_w"], params["l1_b"],
      params["l2_w"], params["l2_b"])

    return out[:n_graphs]                 # (n_graphs, n_classes) f32 logits


@functools.partial(jax.jit, static_argnames=("this_batch_num",))
def classifier_forward(params, a_blocks, node_feats, this_batch_num):
    return classifier_pallas(a_blocks, node_feats, params, this_batch_num)


# ----------------------------------------------------------------------------
# Pure-JAX float32 reference (mirrors the PyTorch forward, incl. row-major .view)
# ----------------------------------------------------------------------------
def reference_forward(params, a_blocks, node_feats, n):
    k = NODES_PER_GRAPH
    h = node_feats.reshape(n, k, -1)
    for w, b in ((params["gc1_w"], params["gc1_b"]),
                 (params["gc2_w"], params["gc2_b"]),
                 (params["gc3_w"], params["gc3_b"])):
        h = jnp.maximum(jnp.matmul(a_blocks, jnp.matmul(h, w)) + b, 0.0)
    h = h.reshape(n, -1)                                # == torch h.view(n, -1)
    h = jnp.maximum(h @ params["l1_w"] + params["l1_b"], 0.0)
    return h @ params["l2_w"] + params["l2_b"]


# ----------------------------------------------------------------------------
# Test-harness helpers
# ----------------------------------------------------------------------------
def build_normalized_adjacency(n_graphs, nodes_per_graph):
    """Per-graph symmetric-normalized ring graph with self loops: (G, 82, 82)."""
    k = nodes_per_graph
    idx = jnp.arange(k)
    adj = jnp.zeros((k, k), jnp.float32)
    adj = adj.at[idx, idx].set(1.0)                     # self loops
    adj = adj.at[idx, (idx + 1) % k].set(1.0)           # ring edges
    adj = adj.at[(idx + 1) % k, idx].set(1.0)
    deg = jnp.sum(adj, axis=1)
    d_inv_sqrt = 1.0 / jnp.sqrt(deg)
    a_hat = adj * d_inv_sqrt[:, None] * d_inv_sqrt[None, :]
    return jnp.tile(a_hat[None, :, :], (n_graphs, 1, 1))


def init_params(key, in_dim, hidden_dim, fc_dim, n_classes):
    ks = jax.random.split(key, 10)
    s = 0.1
    # nn.Linear weights are conceptually PyTorch-style (out, in); converted
    # ONCE here to the kernel layout (no per-call transposes).
    l1_w_torch = s * jax.random.normal(
        ks[6], (fc_dim, NODES_PER_GRAPH * hidden_dim), jnp.float32)
    l2_w_torch = s * jax.random.normal(ks[8], (n_classes, fc_dim), jnp.float32)
    return {
        # GraphConv weights stored as (in, out) (DGL convention: feat @ W)
        "gc1_w": s * jax.random.normal(ks[0], (in_dim, hidden_dim), jnp.float32),
        "gc1_b": s * jax.random.normal(ks[1], (1, hidden_dim), jnp.float32),
        "gc2_w": s * jax.random.normal(ks[2], (hidden_dim, hidden_dim), jnp.float32),
        "gc2_b": s * jax.random.normal(ks[3], (1, hidden_dim), jnp.float32),
        "gc3_w": s * jax.random.normal(ks[4], (hidden_dim, hidden_dim), jnp.float32),
        "gc3_b": s * jax.random.normal(ks[5], (1, hidden_dim), jnp.float32),
        # l1_w row index == node-major flat index k*hidden + j (matches .view)
        "l1_w": l1_w_torch.T,                            # (82*hidden, fc_dim)
        "l1_b": s * jax.random.normal(ks[7], (1, fc_dim), jnp.float32),
        "l2_w": l2_w_torch.T,                            # (fc_dim, n_classes)
        "l2_b": s * jax.random.normal(ks[9], (1, n_classes), jnp.float32),
    }


def cast_matmul_weights(params, dtype):
    """Cast MXU operands to `dtype`; biases (and the final logits) stay f32."""
    out = dict(params)
    for name in ("gc1_w", "gc2_w", "gc3_w", "l1_w", "l2_w"):
        out[name] = params[name].astype(dtype)
    return out


if __name__ == "__main__":
    in_dim, hidden_dim, fc_dim, n_classes = 4, 32, 64, 3
    this_batch_num = 2
    n_nodes = this_batch_num * NODES_PER_GRAPH           # 164

    key = jax.random.PRNGKey(0)
    k_feat, k_param = jax.random.split(key)

    node_feats = jax.random.normal(k_feat, (n_nodes, in_dim), jnp.float32)
    a_blocks = build_normalized_adjacency(this_batch_num, NODES_PER_GRAPH)
    params = init_params(k_param, in_dim, hidden_dim, fc_dim, n_classes)

    ref = reference_forward(params, a_blocks, node_feats, this_batch_num)

    # float32 operands: tight check against the reference.
    logits = classifier_forward(params, a_blocks, node_feats, this_batch_num)
    jax.block_until_ready(logits)
    assert logits.shape == (this_batch_num, n_classes)
    assert jnp.all(jnp.isfinite(logits))
    assert jnp.allclose(logits, ref, atol=1e-3, rtol=1e-3), (logits, ref)

    # bf16 matmul operands with f32 accumulation (deployment configuration):
    # looser tolerance vs. the f32 reference.
    params_bf16 = cast_matmul_weights(params, jnp.bfloat16)
    logits_bf16 = classifier_forward(params_bf16, a_blocks, node_feats,
                                     this_batch_num)
    jax.block_until_ready(logits_bf16)
    assert logits_bf16.shape == (this_batch_num, n_classes)
    assert jnp.all(jnp.isfinite(logits_bf16))
    assert jnp.allclose(logits_bf16, ref, atol=5e-2, rtol=5e-2), (logits_bf16, ref)

    print("KERNEL_OK")
</pallas_src>

<mosaic_0001>
module attributes {stable_mosaic.version = 11 : i64} {
  func.func @_mlp_head_kernel(%arg0: i32, %arg1: memref<2x2624xf32, #tpu.memory_space<vmem>>, %arg2: memref<2624x64xf32, #tpu.memory_space<vmem>>, %arg3: memref<1x64xf32, #tpu.memory_space<vmem>>, %arg4: memref<64x3xf32, #tpu.memory_space<vmem>>, %arg5: memref<1x3xf32, #tpu.memory_space<vmem>>, %arg6: memref<2x3xf32, #tpu.memory_space<vmem>>) attributes {dimension_semantics = [#tpu.dimension_semantics<parallel>], iteration_bounds = array<i64: 1>, scalar_prefetch = 0 : i64, scratch_operands = 0 : i64, tpu.core_type = #tpu.core_type<tc>, window_params = [{transform_indices = @transform_0, window_bounds = array<i64: 2, 2624>}, {pipeline_mode = #tpu.pipeline_mode<synchronous>, transform_indices = @transform_1, window_bounds = array<i64: 2624, 64>}, {pipeline_mode = #tpu.pipeline_mode<synchronous>, transform_indices = @transform_2, window_bounds = array<i64: 1, 64>}, {pipeline_mode = #tpu.pipeline_mode<synchronous>, transform_indices = @transform_3, window_bounds = array<i64: 64, 3>}, {pipeline_mode = #tpu.pipeline_mode<synchronous>, transform_indices = @transform_4, window_bounds = array<i64: 1, 3>}, {transform_indices = @transform_5, window_bounds = array<i64: 2, 3>}]} {
    %c0 = arith.constant 0 : index
    %c0_0 = arith.constant 0 : index
    %0 = vector.load %arg1[%c0, %c0_0] : memref<2x2624xf32, #tpu.memory_space<vmem>>, vector<2x2624xf32>
    %c0_1 = arith.constant 0 : index
    %c0_2 = arith.constant 0 : index
    %1 = vector.load %arg2[%c0_1, %c0_2] : memref<2624x64xf32, #tpu.memory_space<vmem>>, vector<2624x64xf32>
    %cst = arith.constant dense<0.000000e+00> : vector<2x64xf32>
    %2 = tpu.matmul %0, %1, %cst {dimension_numbers = #tpu.dot_dimension_numbers<[1], [0], [0], [1], [0, 0, 1, 1], [], []>} : vector<2x2624xf32>, vector<2624x64xf32>, vector<2x64xf32> -> vector<2x64xf32>
    %c0_3 = arith.constant 0 : index
    %c0_4 = arith.constant 0 : index
    %3 = vector.load %arg3[%c0_3, %c0_4] : memref<1x64xf32, #tpu.memory_space<vmem>>, vector<1x64xf32>
    %4 = vector.broadcast %3 : vector<1x64xf32> to vector<2x64xf32>
    %5 = arith.addf %2, %4 : vector<2x64xf32>
    %cst_5 = arith.constant 0.000000e+00 : f32
    %6 = vector.broadcast %cst_5 : f32 to vector<2x64xf32>
    %7 = arith.maximumf %5, %6 : vector<2x64xf32>
    %c0_6 = arith.constant 0 : index
    %c0_7 = arith.constant 0 : index
    %8 = vector.load %arg4[%c0_6, %c0_7] : memref<64x3xf32, #tpu.memory_space<vmem>>, vector<64x3xf32>
    %cst_8 = arith.constant dense<0.000000e+00> : vector<2x3xf32>
    %9 = tpu.matmul %7, %8, %cst_8 {dimension_numbers = #tpu.dot_dimension_numbers<[1], [0], [0], [1], [0, 0, 1, 1], [], []>} : vector<2x64xf32>, vector<64x3xf32>, vector<2x3xf32> -> vector<2x3xf32>
    %c0_9 = arith.constant 0 : index
    %c0_10 = arith.constant 0 : index
    %10 = vector.load %arg5[%c0_9, %c0_10] : memref<1x3xf32, #tpu.memory_space<vmem>>, vector<1x3xf32>
    %11 = vector.broadcast %10 : vector<1x3xf32> to vector<2x3xf32>
    %12 = arith.addf %9, %11 : vector<2x3xf32>
    %c0_11 = arith.constant 0 : index
    %c0_12 = arith.constant 0 : index
    %13 = vector.load %arg6[%c0_11, %c0_12] : memref<2x3xf32, #tpu.memory_space<vmem>>, vector<2x3xf32>
    tpu.vector_store %arg6[%c0_11, %c0_12], %12 {strides = array<i32>} : memref<2x3xf32, #tpu.memory_space<vmem>>, vector<2x3xf32>,
    return
  }
  func.func @transform_0(%arg0: i32) -> (i32, i32) {
    %c0_i32 = arith.constant 0 : i32
    %c0_i32_0 = arith.constant 0 : i32
    return %arg0, %c0_i32 : i32, i32
  }
  func.func @transform_1(%arg0: i32) -> (i32, i32) {
    %c0_i32 = arith.constant 0 : i32
    %c0_i32_0 = arith.constant 0 : i32
    %c0_i32_1 = arith.constant 0 : i32
    return %c0_i32, %c0_i32_0 : i32, i32
  }
  func.func @transform_2(%arg0: i32) -> (i32, i32) {
    %c0_i32 = arith.constant 0 : i32
    %c0_i32_0 = arith.constant 0 : i32
    %c0_i32_1 = arith.constant 0 : i32
    return %c0_i32, %c0_i32_0 : i32, i32
  }
  func.func @transform_3(%arg0: i32) -> (i32, i32) {
    %c0_i32 = arith.constant 0 : i32
    %c0_i32_0 = arith.constant 0 : i32
    %c0_i32_1 = arith.constant 0 : i32
    return %c0_i32, %c0_i32_0 : i32, i32
  }
  func.func @transform_4(%arg0: i32) -> (i32, i32) {
    %c0_i32 = arith.constant 0 : i32
    %c0_i32_0 = arith.constant 0 : i32
    %c0_i32_1 = arith.constant 0 : i32
    return %c0_i32, %c0_i32_0 : i32, i32
  }
  func.func @transform_5(%arg0: i32) -> (i32, i32) {
    %c0_i32 = arith.constant 0 : i32
    %c0_i32_0 = arith.constant 0 : i32
    return %arg0, %c0_i32 : i32, i32
  }
}

module attributes {stable_mosaic.version = 11 : i64} {
  func.func @_gcn_kernel(%arg0: i32, %arg1: memref<1x82x82xf32, #tpu.memory_space<vmem>>, %arg2: memref<1x82x4xf32, #tpu.memory_space<vmem>>, %arg3: memref<4x32xf32, #tpu.memory_space<vmem>>, %arg4: memref<1x32xf32, #tpu.memory_space<vmem>>, %arg5: memref<32x32xf32, #tpu.memory_space<vmem>>, %arg6: memref<1x32xf32, #tpu.memory_space<vmem>>, %arg7: memref<32x32xf32, #tpu.memory_space<vmem>>, %arg8: memref<1x32xf32, #tpu.memory_space<vmem>>, %arg9: memref<1x82x32xf32, #tpu.memory_space<vmem>>) attributes {dimension_semantics = [#tpu.dimension_semantics<parallel>], iteration_bounds = array<i64: 2>, scalar_prefetch = 0 : i64, scratch_operands = 0 : i64, tpu.core_type = #tpu.core_type<tc>, window_params = [{transform_indices = @transform_0, window_bounds = array<i64: 1, 82, 82>}, {transform_indices = @transform_1, window_bounds = array<i64: 1, 82, 4>}, {pipeline_mode = #tpu.pipeline_mode<synchronous>, transform_indices = @transform_2, window_bounds = array<i64: 4, 32>}, {pipeline_mode = #tpu.pipeline_mode<synchronous>, transform_indices = @transform_3, window_bounds = array<i64: 1, 32>}, {pipeline_mode = #tpu.pipeline_mode<synchronous>, transform_indices = @transform_4, window_bounds = array<i64: 32, 32>}, {pipeline_mode = #tpu.pipeline_mode<synchronous>, transform_indices = @transform_5, window_bounds = array<i64: 1, 32>}, {pipeline_mode = #tpu.pipeline_mode<synchronous>, transform_indices = @transform_6, window_bounds = array<i64: 32, 32>}, {pipeline_mode = #tpu.pipeline_mode<synchronous>, transform_indices = @transform_7, window_bounds = array<i64: 1, 32>}, {transform_indices = @transform_8, window_bounds = array<i64: 1, 82, 32>}]} {
    %c0 = arith.constant 0 : index
    %c0_0 = arith.constant 0 : index
    %c0_1 = arith.constant 0 : index
    %0 = vector.load %arg1[%c0, %c0_0, %c0_1] : memref<1x82x82xf32, #tpu.memory_space<vmem>>, vector<1x82x82xf32>
    %c0_2 = arith.constant 0 : index
    %c0_3 = arith.constant 0 : index
    %c0_4 = arith.constant 0 : index
    %1 = vector.load %arg2[%c0_2, %c0_3, %c0_4] : memref<1x82x4xf32, #tpu.memory_space<vmem>>, vector<1x82x4xf32>
    %c0_5 = arith.constant 0 : index
    %c0_6 = arith.constant 0 : index
    %2 = vector.load %arg3[%c0_5, %c0_6] : memref<4x32xf32, #tpu.memory_space<vmem>>, vector<4x32xf32>
    %3 = vector.shape_cast %2 : vector<4x32xf32> to vector<1x4x32xf32>
    "tpu.trace_start"() <{level = 10 : i32, message = "gni,gio->gno"}> : () -> ()
    %cst = arith.constant dense<0.000000e+00> : vector<1x82x32xf32>
    %4 = tpu.matmul %1, %3, %cst {dimension_numbers = #tpu.dot_dimension_numbers<[2], [1], [1], [2], [0, 0, 0, 1, 1, 2], [0], [0]>} : vector<1x82x4xf32>, vector<1x4x32xf32>, vector<1x82x32xf32> -> vector<1x82x32xf32>
    "tpu.trace_stop"() : () -> ()
    "tpu.trace_start"() <{level = 10 : i32, message = "gnm,gmo->gno"}> : () -> ()
    %cst_7 = arith.constant dense<0.000000e+00> : vector<1x82x32xf32>
    %5 = tpu.matmul %0, %4, %cst_7 {dimension_numbers = #tpu.dot_dimension_numbers<[2], [1], [1], [2], [0, 0, 0, 1, 1, 2], [0], [0]>} : vector<1x82x82xf32>, vector<1x82x32xf32>, vector<1x82x32xf32> -> vector<1x82x32xf32>
    "tpu.trace_stop"() : () -> ()
    %c0_8 = arith.constant 0 : index
    %c0_9 = arith.constant 0 : index
    %6 = vector.load %arg4[%c0_8, %c0_9] : memref<1x32xf32, #tpu.memory_space<vmem>>, vector<1x32xf32>
    %7 = vector.shape_cast %6 : vector<1x32xf32> to vector<1x1x32xf32>
    %8 = vector.broadcast %7 : vector<1x1x32xf32> to vector<1x82x32xf32>
    %9 = arith.addf %5, %8 : vector<1x82x32xf32>
    %cst_10 = arith.constant 0.000000e+00 : f32
    %10 = vector.broadcast %cst_10 : f32 to vector<1x82x32xf32>
    %11 = arith.maximumf %9, %10 : vector<1x82x32xf32>
    %c0_11 = arith.constant 0 : index
    %c0_12 = arith.constant 0 : index
    %12 = vector.load %arg5[%c0_11, %c0_12] : memref<32x32xf32, #tpu.memory_space<vmem>>, vector<32x32xf32>
    %13 = vector.shape_cast %12 : vector<32x32xf32> to vector<1x32x32xf32>
    "tpu.trace_start"() <{level = 10 : i32, message = "gni,gio->gno"}> : () -> ()
    %cst_13 = arith.constant dense<0.000000e+00> : vector<1x82x32xf32>
    %14 = tpu.matmul %11, %13, %cst_13 {dimension_numbers = #tpu.dot_dimension_numbers<[2], [1], [1], [2], [0, 0, 0, 1, 1, 2], [0], [0]>} : vector<1x82x32xf32>, vector<1x32x32xf32>, vector<1x82x32xf32> -> vector<1x82x32xf32>
    "tpu.trace_stop"() : () -> ()
    "tpu.trace_start"() <{level = 10 : i32, message = "gnm,gmo->gno"}> : () -> ()
    %cst_14 = arith.constant dense<0.000000e+00> : vector<1x82x32xf32>
    %15 = tpu.matmul %0, %14, %cst_14 {dimension_numbers = #tpu.dot_dimension_numbers<[2], [1], [1], [2], [0, 0, 0, 1, 1, 2], [0], [0]>} : vector<1x82x82xf32>, vector<1x82x32xf32>, vector<1x82x32xf32> -> vector<1x82x32xf32>
    "tpu.trace_stop"() : () -> ()
    %c0_15 = arith.constant 0 : index
    %c0_16 = arith.constant 0 : index
    %16 = vector.load %arg6[%c0_15, %c0_16] : memref<1x32xf32, #tpu.memory_space<vmem>>, vector<1x32xf32>
    %17 = vector.shape_cast %16 : vector<1x32xf32> to vector<1x1x32xf32>
    %18 = vector.broadcast %17 : vector<1x1x32xf32> to vector<1x82x32xf32>
    %19 = arith.addf %15, %18 : vector<1x82x32xf32>
    %cst_17 = arith.constant 0.000000e+00 : f32
    %20 = vector.broadcast %cst_17 : f32 to vector<1x82x32xf32>
    %21 = arith.maximumf %19, %20 : vector<1x82x32xf32>
    %c0_18 = arith.constant 0 : index
    %c0_19 = arith.constant 0 : index
    %22 = vector.load %arg7[%c0_18, %c0_19] : memref<32x32xf32, #tpu.memory_space<vmem>>, vector<32x32xf32>
    %23 = vector.shape_cast %22 : vector<32x32xf32> to vector<1x32x32xf32>
    "tpu.trace_start"() <{level = 10 : i32, message = "gni,gio->gno"}> : () -> ()
    %cst_20 = arith.constant dense<0.000000e+00> : vector<1x82x32xf32>
    %24 = tpu.matmul %21, %23, %cst_20 {dimension_numbers = #tpu.dot_dimension_numbers<[2], [1], [1], [2], [0, 0, 0, 1, 1, 2], [0], [0]>} : vector<1x82x32xf32>, vector<1x32x32xf32>, vector<1x82x32xf32> -> vector<1x82x32xf32>
    "tpu.trace_stop"() : () -> ()
    "tpu.trace_start"() <{level = 10 : i32, message = "gnm,gmo->gno"}> : () -> ()
    %cst_21 = arith.constant dense<0.000000e+00> : vector<1x82x32xf32>
    %25 = tpu.matmul %0, %24, %cst_21 {dimension_numbers = #tpu.dot_dimension_numbers<[2], [1], [1], [2], [0, 0, 0, 1, 1, 2], [0], [0]>} : vector<1x82x82xf32>, vector<1x82x32xf32>, vector<1x82x32xf32> -> vector<1x82x32xf32>
    "tpu.trace_stop"() : () -> ()
    %c0_22 = arith.constant 0 : index
    %c0_23 = arith.constant 0 : index
    %26 = vector.load %arg8[%c0_22, %c0_23] : memref<1x32xf32, #tpu.memory_space<vmem>>, vector<1x32xf32>
    %27 = vector.shape_cast %26 : vector<1x32xf32> to vector<1x1x32xf32>
    %28 = vector.broadcast %27 : vector<1x1x32xf32> to vector<1x82x32xf32>
    %29 = arith.addf %25, %28 : vector<1x82x32xf32>
    %cst_24 = arith.constant 0.000000e+00 : f32
    %30 = vector.broadcast %cst_24 : f32 to vector<1x82x32xf32>
    %31 = arith.maximumf %29, %30 : vector<1x82x32xf32>
    %c0_25 = arith.constant 0 : index
    %c0_26 = arith.constant 0 : index
    %c0_27 = arith.constant 0 : index
    %32 = vector.load %arg9[%c0_25, %c0_26, %c0_27] : memref<1x82x32xf32, #tpu.memory_space<vmem>>, vector<1x82x32xf32>
    tpu.vector_store %arg9[%c0_25, %c0_26, %c0_27], %31 {strides = array<i32>} : memref<1x82x32xf32, #tpu.memory_space<vmem>>, vector<1x82x32xf32>,
    return
  }
  func.func @transform_0(%arg0: i32) -> (i32, i32, i32) {
    %c0_i32 = arith.constant 0 : i32
    %c0_i32_0 = arith.constant 0 : i32
    %c0_i32_1 = arith.constant 0 : i32
    return %arg0, %c0_i32, %c0_i32_0 : i32, i32, i32
  }
  func.func @transform_1(%arg0: i32) -> (i32, i32, i32) {
    %c0_i32 = arith.constant 0 : i32
    %c0_i32_0 = arith.constant 0 : i32
    %c0_i32_1 = arith.constant 0 : i32
    return %arg0, %c0_i32, %c0_i32_0 : i32, i32, i32
  }
  func.func @transform_2(%arg0: i32) -> (i32, i32) {
    %c0_i32 = arith.constant 0 : i32
    %c0_i32_0 = arith.constant 0 : i32
    %c0_i32_1 = arith.constant 0 : i32
    return %c0_i32, %c0_i32_0 : i32, i32
  }
  func.func @transform_3(%arg0: i32) -> (i32, i32) {
    %c0_i32 = arith.constant 0 : i32
    %c0_i32_0 = arith.constant 0 : i32
    %c0_i32_1 = arith.constant 0 : i32
    return %c0_i32, %c0_i32_0 : i32, i32
  }
  func.func @transform_4(%arg0: i32) -> (i32, i32) {
    %c0_i32 = arith.constant 0 : i32
    %c0_i32_0 = arith.constant 0 : i32
    %c0_i32_1 = arith.constant 0 : i32
    return %c0_i32, %c0_i32_0 : i32, i32
  }
  func.func @transform_5(%arg0: i32) -> (i32, i32) {
    %c0_i32 = arith.constant 0 : i32
    %c0_i32_0 = arith.constant 0 : i32
    %c0_i32_1 = arith.constant 0 : i32
    return %c0_i32, %c0_i32_0 : i32, i32
  }
  func.func @transform_6(%arg0: i32) -> (i32, i32) {
    %c0_i32 = arith.constant 0 : i32
    %c0_i32_0 = arith.constant 0 : i32
    %c0_i32_1 = arith.constant 0 : i32
    return %c0_i32, %c0_i32_0 : i32, i32
  }
  func.func @transform_7(%arg0: i32) -> (i32, i32) {
    %c0_i32 = arith.constant 0 : i32
    %c0_i32_0 = arith.constant 0 : i32
    %c0_i32_1 = arith.constant 0 : i32
    return %c0_i32, %c0_i32_0 : i32, i32
  }
  func.func @transform_8(%arg0: i32) -> (i32, i32, i32) {
    %c0_i32 = arith.constant 0 : i32
    %c0_i32_0 = arith.constant 0 : i32
    %c0_i32_1 = arith.constant 0 : i32
    return %arg0, %c0_i32, %c0_i32_0 : i32, i32, i32
  }
}

</mosaic_0001>

<llo_original>
// kernel: classifier_forward.2
$region0: #{classifier_forward.2}
  #allocation0 [shape = 'u32[]', space=smem, size = 0x4, offset = 0x4, fixed_abs, tag = 'smem constant byte address 0x4 - core index']
  #allocation1 [shape = 'u32[144,128]{1,0:T(1,128)}', space=vmem, size = 0x12000, scoped, tag = 'internal scratch']
  %s0 = inlined_call_operand.vmem [shape: f32[2,82,82], index: 0, kind: input, shape index: {}]
  %s1 = inlined_call_operand.vmem [shape: f32[2,82,4], index: 1, kind: input, shape index: {}]
  %s2 = inlined_call_operand.hbm [shape: f32[4,32], index: 2, kind: input, shape index: {}]
  %s3 = inlined_call_operand.hbm [shape: f32[1,32], index: 3, kind: input, shape index: {}]
  %s4 = inlined_call_operand.hbm [shape: f32[32,32], index: 4, kind: input, shape index: {}]
  %s5 = inlined_call_operand.hbm [shape: f32[1,32], index: 5, kind: input, shape index: {}]
  %s6 = inlined_call_operand.hbm [shape: f32[32,32], index: 6, kind: input, shape index: {}]
  %s7 = inlined_call_operand.hbm [shape: f32[1,32], index: 7, kind: input, shape index: {}]
  %s8 = inlined_call_operand.vmem [shape: f32[2,82,32], index: 8, kind: output, shape index: {}]
  %s9 = sld [smem:[#allocation0]]
  $region89: #{classifier_forward.2} parent=0
    _
  %s11 = ssub.s32 1, %s9
  %s12 = scalar_select 0, %s11, %s9
  $region1: #{classifier_forward.2} parent=0
    #allocation2 [shape = 'u8[2048]{0}', space=vmem, size = 0x800, scoped, tag = 'input window, operand 2, single buffered']
    #allocation3 [shape = 's32[2]{0}', space=sflag, size = 0x8, scoped, tag = 'scoped memory for classifier_forward.2']
    #allocation4 [shape = 'u8[512]{0}', space=vmem, size = 0x400, scoped, tag = 'input window, operand 3, single buffered']
    #allocation5 [shape = 's32[1]{0}', space=sflag, size = 0x4, scoped, tag = 'scoped memory for classifier_forward.2']
    #allocation6 [shape = 'u8[16384]{0}', space=vmem, size = 0x4000, scoped, tag = 'input window, operand 4, single buffered']
    #allocation7 [shape = 'u8[512]{0}', space=vmem, size = 0x400, scoped, tag = 'input window, operand 5, single buffered']
    #allocation8 [shape = 's32[1]{0}', space=sflag, size = 0x4, scoped, tag = 'scoped memory for classifier_forward.2']
    #allocation9 [shape = 'u8[16384]{0}', space=vmem, size = 0x4000, scoped, tag = 'input window, operand 6, single buffered']
    #allocation10 [shape = 'u8[512]{0}', space=vmem, size = 0x400, scoped, tag = 'input window, operand 7, single buffered']
    #allocation11 [shape = 's32[1]{0}', space=sflag, size = 0x4, scoped, tag = 'scoped memory for classifier_forward.2']
    %13 = vsyncpa [#allocation3], 0
    %14 = vsyncpa [#allocation5], 0
    %15 = vsyncpa [#allocation8], 0
    %16 = vsyncpa [#allocation11], 0
    loop: start=0, step=1, limit=4
    $region2: #{classifier_forward.2} parent=1 // loop_pre_header
      _
    $region3: #{classifier_forward.2} parent=1 // loop_header
      %s18 = sphi 0, %s22
      %p19 = scmp.ge.s32.totalorder %s18, 4
      %s28 = sphi 0, %s30
      %s31 = sphi 0, %s28
      %s32 = sphi 0, %s31
      %s48 = sphi 0, %s32
      %s54 = sphi 0, %s56
      %s57 = sphi 0, %s54
      %s58 = sphi 0, %s57
      %s74 = sphi 0, %s58
      %s78 = sphi 0, %s78
      %s80 = sphi 0, %s78
      %s81 = sphi 0, %s80
      %s95 = sphi 0, %s81
      %s99 = sphi 0, %s99
      %s101 = sphi 0, %s99
      %s102 = sphi 0, %s101
      %s116 = sphi 0, %s102
      %s120 = sphi 0, %s120
      %s122 = sphi 0, %s120
      %s123 = sphi 0, %s122
      %s137 = sphi 0, %s123
      %s141 = sphi 0, %s141
      %s143 = sphi 0, %s141
      %s144 = sphi 0, %s143
      %s158 = sphi 0, %s144
      %s162 = sphi 0, %s162
      %s164 = sphi 0, %s162
      %s165 = sphi 0, %s164
      %s179 = sphi 0, %s165
      %s183 = sphi 0, %s183
      %s185 = sphi 0, %s183
      %s186 = sphi 0, %s185
      %s200 = sphi 0, %s186
      %s206 = sphi 0, %s208
      %s209 = sphi 0, %s206
      %s210 = sphi 0, %s209
      %s226 = sphi 0, %s210
    $region4: #{classifier_forward.2} parent=1 // loop_header_branch
      %21 = sbr.rel (%p19) target = $region8
    $region5: #{classifier_forward.2} parent=1 // loop_body
      %s23 = ssub.s32 %s18, 1
      %s24 = ssub.s32 %s18, 2
      %s25 = sadd.s32 %s18, 1
      %s26 = ssub.s32 %s18, %s25
      %p27 = scmp.eq.s32.totalorder %s26, 0
      %s29 = sadd.s32 %s28, 1
      %s30 = scalar_select %p27, %s28, %s29
      %p33 = pneg %p27
      %p34 = scmp.eq.s32.totalorder %s18, 1
      %p35 = por %p33, %p34
      %p36 = scmp.ne.s32.totalorder %s28, %s31
      %p37 = scmp.eq.s32.totalorder %s18, 0
      %p38 = por %p36, %p37
      %p39 = scmp.ne.s32.totalorder %s28, %s31
      %p40 = scmp.eq.s32.totalorder %s23, 1
      %p41 = por %p39, %p40
      %p42 = scmp.ne.s32.totalorder %s31, %s32
      %p43 = scmp.eq.s32.totalorder %s23, 0
      %p44 = por %p42, %p43
      %p45 = scmp.ne.s32.totalorder %s31, %s32
      %p46 = scmp.eq.s32.totalorder %s24, 1
      %p47 = por %p45, %p46
      %p49 = scmp.ne.s32.totalorder %s32, %s48
      %p50 = scmp.eq.s32.totalorder %s24, 0
      %p51 = por %p49, %p50
      %s52 = ssub.s32 %s18, %s25
      %p53 = scmp.eq.s32.totalorder %s52, 0
      %s55 = sadd.s32 %s54, 1
      %s56 = scalar_select %p53, %s54, %s55
      %p59 = pneg %p53
      %p60 = scmp.eq.s32.totalorder %s18, 1
      %p61 = por %p59, %p60
      %p62 = scmp.ne.s32.totalorder %s54, %s57
      %p63 = scmp.eq.s32.totalorder %s18, 0
      %p64 = por %p62, %p63
      %p65 = scmp.ne.s32.totalorder %s54, %s57
      %p66 = scmp.eq.s32.totalorder %s23, 1
      %p67 = por %p65, %p66
      %p68 = scmp.ne.s32.totalorder %s57, %s58
      %p69 = scmp.eq.s32.totalorder %s23, 0
      %p70 = por %p68, %p69
      %p71 = scmp.ne.s32.totalorder %s57, %s58
      %p72 = scmp.eq.s32.totalorder %s24, 1
      %p73 = por %p71, %p72
      %p75 = scmp.ne.s32.totalorder %s58, %s74
      %p76 = scmp.eq.s32.totalorder %s24, 0
      %p77 = por %p75, %p76
      %s79 = sadd.s32 %s78, 1
      %p82 = scmp.eq.s32.totalorder %s18, 1
      %p83 = scmp.ne.s32.totalorder %s78, %s80
      %p84 = scmp.eq.s32.totalorder %s18, 0
      %p85 = por %p83, %p84
      %p86 = scmp.ne.s32.totalorder %s78, %s80
      %p87 = scmp.eq.s32.totalorder %s23, 1
      %p88 = por %p86, %p87
      %p89 = scmp.ne.s32.totalorder %s80, %s81
      %p90 = scmp.eq.s32.totalorder %s23, 0
      %p91 = por %p89, %p90
      %p92 = scmp.ne.s32.totalorder %s80, %s81
      %p93 = scmp.eq.s32.totalorder %s24, 1
      %p94 = por %p92, %p93
      %p96 = scmp.ne.s32.totalorder %s81, %s95
      %p97 = scmp.eq.s32.totalorder %s24, 0
      %p98 = por %p96, %p97
      %s100 = sadd.s32 %s99, 1
      %p103 = scmp.eq.s32.totalorder %s18, 1
      %p104 = scmp.ne.s32.totalorder %s99, %s101
      %p105 = scmp.eq.s32.totalorder %s18, 0
      %p106 = por %p104, %p105
      %p107 = scmp.ne.s32.totalorder %s99, %s101
      %p108 = scmp.eq.s32.totalorder %s23, 1
      %p109 = por %p107, %p108
      %p110 = scmp.ne.s32.totalorder %s101, %s102
      %p111 = scmp.eq.s32.totalorder %s23, 0
      %p112 = por %p110, %p111
      %p113 = scmp.ne.s32.totalorder %s101, %s102
      %p114 = scmp.eq.s32.totalorder %s24, 1
      %p115 = por %p113, %p114
      %p117 = scmp.ne.s32.totalorder %s102, %s116
      %p118 = scmp.eq.s32.totalorder %s24, 0
      %p119 = por %p117, %p118
      %s121 = sadd.s32 %s120, 1
      %p124 = scmp.eq.s32.totalorder %s18, 1
      %p125 = scmp.ne.s32.totalorder %s120, %s122
      %p126 = scmp.eq.s32.totalorder %s18, 0
      %p127 = por %p125, %p126
      %p128 = scmp.ne.s32.totalorder %s120, %s122
      %p129 = scmp.eq.s32.totalorder %s23, 1
      %p130 = por %p128, %p129
      %p131 = scmp.ne.s32.totalorder %s122, %s123
      %p132 = scmp.eq.s32.totalorder %s23, 0
      %p133 = por %p131, %p132
      %p134 = scmp.ne.s32.totalorder %s122, %s123
      %p135 = scmp.eq.s32.totalorder %s24, 1
      %p136 = por %p134, %p135
      %p138 = scmp.ne.s32.totalorder %s123, %s137
      %p139 = scmp.eq.s32.totalorder %s24, 0
      %p140 = por %p138, %p139
      %s142 = sadd.s32 %s141, 1
      %p145 = scmp.eq.s32.totalorder %s18, 1
      %p146 = scmp.ne.s32.totalorder %s141, %s143
      %p147 = scmp.eq.s32.totalorder %s18, 0
      %p148 = por %p146, %p147
      %p149 = scmp.ne.s32.totalorder %s141, %s143
      %p150 = scmp.eq.s32.totalorder %s23, 1
      %p151 = por %p149, %p150
      %p152 = scmp.ne.s32.totalorder %s143, %s144
      %p153 = scmp.eq.s32.totalorder %s23, 0
      %p154 = por %p152, %p153
      %p155 = scmp.ne.s32.totalorder %s143, %s144
      %p156 = scmp.eq.s32.totalorder %s24, 1
      %p157 = por %p155, %p156
      %p159 = scmp.ne.s32.totalorder %s144, %s158
      %p160 = scmp.eq.s32.totalorder %s24, 0
      %p161 = por %p159, %p160
      %s163 = sadd.s32 %s162, 1
      %p166 = scmp.eq.s32.totalorder %s18, 1
      %p167 = scmp.ne.s32.totalorder %s162, %s164
      %p168 = scmp.eq.s32.totalorder %s18, 0
      %p169 = por %p167, %p168
      %p170 = scmp.ne.s32.totalorder %s162, %s164
      %p171 = scmp.eq.s32.totalorder %s23, 1
      %p172 = por %p170, %p171
      %p173 = scmp.ne.s32.totalorder %s164, %s165
      %p174 = scmp.eq.s32.totalorder %s23, 0
      %p175 = por %p173, %p174
      %p176 = scmp.ne.s32.totalorder %s164, %s165
      %p177 = scmp.eq.s32.totalorder %s24, 1
      %p178 = por %p176, %p177
      %p180 = scmp.ne.s32.totalorder %s165, %s179
      %p181 = scmp.eq.s32.totalorder %s24, 0
      %p182 = por %p180, %p181
      %s184 = sadd.s32 %s183, 1
      %p187 = scmp.eq.s32.totalorder %s18, 1
      %p188 = scmp.ne.s32.totalorder %s183, %s185
      %p189 = scmp.eq.s32.totalorder %s18, 0
      %p190 = por %p188, %p189
      %p191 = scmp.ne.s32.totalorder %s183, %s185
      %p192 = scmp.eq.s32.totalorder %s23, 1
      %p193 = por %p191, %p192
      %p194 = scmp.ne.s32.totalorder %s185, %s186
      %p195 = scmp.eq.s32.totalorder %s23, 0
      %p196 = por %p194, %p195
      %p197 = scmp.ne.s32.totalorder %s185, %s186
      %p198 = scmp.eq.s32.totalorder %s24, 1
      %p199 = por %p197, %p198
      %p201 = scmp.ne.s32.totalorder %s186, %s200
      %p202 = scmp.eq.s32.totalorder %s24, 0
      %p203 = por %p201, %p202
      %s204 = ssub.s32 %s18, %s25
      %p205 = scmp.eq.s32.totalorder %s204, 0
      %s207 = sadd.s32 %s206, 1
      %s208 = scalar_select %p205, %s206, %s207
      %p211 = pneg %p205
      %p212 = scmp.eq.s32.totalorder %s18, 1
      %p213 = por %p211, %p212
      %p214 = scmp.ne.s32.totalorder %s206, %s209
      %p215 = scmp.eq.s32.totalorder %s18, 0
      %p216 = por %p214, %p215
      %p217 = scmp.ne.s32.totalorder %s206, %s209
      %p218 = scmp.eq.s32.totalorder %s23, 1
      %p219 = por %p217, %p218
      %p220 = scmp.ne.s32.totalorder %s209, %s210
      %p221 = scmp.eq.s32.totalorder %s23, 0
      %p222 = por %p220, %p221
      %p223 = scmp.ne.s32.totalorder %s209, %s210
      %p224 = scmp.eq.s32.totalorder %s24, 1
      %p225 = por %p223, %p224
      %p227 = scmp.ne.s32.totalorder %s210, %s226
      %p228 = scmp.eq.s32.totalorder %s24, 0
      %p229 = por %p227, %p228
      %p230 = scmp.le.s32.totalorder 1, %s18
      %p231 = scmp.lt.s32.totalorder %s18, 3
      %p232 = pnand %p230, %p231
      %p233 = pneg %p232
      // Predicated region
      $region9: #{classifier_forward.2} parent=5 // pred_check
        _
      $region10: #{classifier_forward.2} parent=5 // pred_check_branch
        %235 = sbr.rel (%p232) target = $region12
      $region11: #{classifier_forward.2} parent=5 // pred_region
        %s236 = ssub.s32 %s18, 1
        // Predicated region
        $region13: #{classifier_forward.2} parent=11 // pred_check
          %p237 = pneg %p91
        $region14: #{classifier_forward.2} parent=11 // pred_check_branch
          %239 = sbr.rel (%p237) target = $region16
        $region15: #{classifier_forward.2} parent=11 // pred_region
          %s241 = ssub.s32 64, 64
          %242 = vsyncadd [#allocation3], %s241
          %s244 = sshll.u32 [#allocation2], 4
          %s245 = int_to_ptr.vmem [resolvable:$true] %s244
          %247 = dma.hbm_to_vmem [thread:$0]  %s2, 64, %s245, [#allocation3]
        $region16: #{classifier_forward.2} parent=11 // pred_fallthru
          _
        // Predicated region
        $region17: #{classifier_forward.2} parent=11 // pred_check
          %p248 = pneg %p112
        $region18: #{classifier_forward.2} parent=11 // pred_check_branch
          %250 = sbr.rel (%p248) target = $region20
        $region19: #{classifier_forward.2} parent=11 // pred_region
          %s252 = ssub.s32 16, 16
          %253 = vsyncadd [#allocation5], %s252
          %s255 = sshll.u32 [#allocation4], 4
          %s256 = int_to_ptr.vmem [resolvable:$true] %s255
          %258 = dma.hbm_to_vmem [thread:$0]  %s3, 16, %s256, [#allocation5]
        $region20: #{classifier_forward.2} parent=11 // pred_fallthru
          _
        // Predicated region
        $region21: #{classifier_forward.2} parent=11 // pred_check
          %p259 = pneg %p133
        $region22: #{classifier_forward.2} parent=11 // pred_check_branch
          %261 = sbr.rel (%p259) target = $region24
        $region23: #{classifier_forward.2} parent=11 // pred_region
          %s263 = ssub.s32 512, 512
          %264 = vsyncadd [#allocation5], %s263
          %s265 = sshll.u32 [#allocation6], 4
          %s266 = int_to_ptr.vmem [resolvable:$true] %s265
          %271 = dma.hbm_to_vmem [thread:$0]  %s4, 512, %s266, [#allocation5], 128, 128, 8
        $region24: #{classifier_forward.2} parent=11 // pred_fallthru
          _
        // Predicated region
        $region25: #{classifier_forward.2} parent=11 // pred_check
          %p272 = pneg %p154
        $region26: #{classifier_forward.2} parent=11 // pred_check_branch
          %274 = sbr.rel (%p272) target = $region28
        $region27: #{classifier_forward.2} parent=11 // pred_region
          %s276 = ssub.s32 16, 16
          %277 = vsyncadd [#allocation8], %s276
          %s279 = sshll.u32 [#allocation7], 4
          %s280 = int_to_ptr.vmem [resolvable:$true] %s279
          %282 = dma.hbm_to_vmem [thread:$0]  %s5, 16, %s280, [#allocation8]
        $region28: #{classifier_forward.2} parent=11 // pred_fallthru
          _
        // Predicated region
        $region29: #{classifier_forward.2} parent=11 // pred_check
          %p283 = pneg %p175
        $region30: #{classifier_forward.2} parent=11 // pred_check_branch
          %285 = sbr.rel (%p283) target = $region32
        $region31: #{classifier_forward.2} parent=11 // pred_region
          %s287 = ssub.s32 512, 512
          %288 = vsyncadd [#allocation8], %s287
          %s289 = sshll.u32 [#allocation9], 4
          %s290 = int_to_ptr.vmem [resolvable:$true] %s289
          %295 = dma.hbm_to_vmem [thread:$0]  %s6, 512, %s290, [#allocation8], 128, 128, 8
        $region32: #{classifier_forward.2} parent=11 // pred_fallthru
          _
        // Predicated region
        $region33: #{classifier_forward.2} parent=11 // pred_check
          %p296 = pneg %p196
        $region34: #{classifier_forward.2} parent=11 // pred_check_branch
          %298 = sbr.rel (%p296) target = $region36
        $region35: #{classifier_forward.2} parent=11 // pred_region
          %s300 = ssub.s32 16, 16
          %301 = vsyncadd [#allocation11], %s300
          %s303 = sshll.u32 [#allocation10], 4
          %s304 = int_to_ptr.vmem [resolvable:$true] %s303
          %306 = dma.hbm_to_vmem [thread:$0]  %s7, 16, %s304, [#allocation11]
        $region36: #{classifier_forward.2} parent=11 // pred_fallthru
          _
      $region12: #{classifier_forward.2} parent=5 // pred_fallthru
        _
      %p307 = scmp.lt.s32.totalorder %s18, 2
      // Predicated region
      $region37: #{classifier_forward.2} parent=5 // pred_check
        %p308 = pneg %p307
      $region38: #{classifier_forward.2} parent=5 // pred_check_branch
        %310 = sbr.rel (%p308) target = $region40
      $region39: #{classifier_forward.2} parent=5 // pred_region
        // Predicated region
        $region41: #{classifier_forward.2} parent=39 // pred_check
          %p311 = pneg %p38
        $region42: #{classifier_forward.2} parent=39 // pred_check_branch
          %313 = sbr.rel (%p311) target = $region44
        $region43: #{classifier_forward.2} parent=39 // pred_region
          %p314 = scmp.lt.s32.totalorder %s18, 1
          %s315 = scalar_select %p314, %s18, 1
          %s316 = smul.addr %s315, 11
          %s317 = smul.addr %s316, 8
          %s318 = scalar_lea.vmem %s0, %s317
        $region44: #{classifier_forward.2} parent=39 // pred_fallthru
          _
        // Predicated region
        $region45: #{classifier_forward.2} parent=39 // pred_check
          %p319 = pneg %p64
        $region46: #{classifier_forward.2} parent=39 // pred_check_branch
          %321 = sbr.rel (%p319) target = $region48
        $region47: #{classifier_forward.2} parent=39 // pred_region
          %p322 = scmp.lt.s32.totalorder %s18, 1
          %s323 = scalar_select %p322, %s18, 1
          %s324 = smul.addr %s323, 11
          %s325 = smul.addr %s324, 8
          %s326 = scalar_lea.vmem %s1, %s325
        $region48: #{classifier_forward.2} parent=39 // pred_fallthru
          _
      $region40: #{classifier_forward.2} parent=5 // pred_fallthru
        _
      %p327 = scmp.le.s32.totalorder 1, %s18
      %p328 = scmp.lt.s32.totalorder %s18, 3
      %p329 = pnand %p327, %p328
      %p330 = pneg %p329
      // Predicated region
      $region49: #{classifier_forward.2} parent=5 // pred_check
        _
      $region50: #{classifier_forward.2} parent=5 // pred_check_branch
        %332 = sbr.rel (%p329) target = $region52
      $region51: #{classifier_forward.2} parent=5 // pred_region
        %s333 = ssub.s32 %s18, 1
        // Predicated region
        $region53: #{classifier_forward.2} parent=51 // pred_check
          %p334 = pneg %p91
        $region54: #{classifier_forward.2} parent=51 // pred_check_branch
          %336 = sbr.rel (%p334) target = $region56
        $region55: #{classifier_forward.2} parent=51 // pred_region
          %337 = dma.done [#allocation3], 64
        $region56: #{classifier_forward.2} parent=51 // pred_fallthru
          _
        // Predicated region
        $region57: #{classifier_forward.2} parent=51 // pred_check
          %p338 = pneg %p112
        $region58: #{classifier_forward.2} parent=51 // pred_check_branch
          %340 = sbr.rel (%p338) target = $region60
        $region59: #{classifier_forward.2} parent=51 // pred_region
          %341 = dma.done [#allocation5], 16
        $region60: #{classifier_forward.2} parent=51 // pred_fallthru
          _
        // Predicated region
        $region61: #{classifier_forward.2} parent=51 // pred_check
          %p342 = pneg %p133
        $region62: #{classifier_forward.2} parent=51 // pred_check_branch
          %344 = sbr.rel (%p342) target = $region64
        $region63: #{classifier_forward.2} parent=51 // pred_region
          %345 = dma.done [#allocation5], 512
        $region64: #{classifier_forward.2} parent=51 // pred_fallthru
          _
        // Predicated region
        $region65: #{classifier_forward.2} parent=51 // pred_check
          %p346 = pneg %p154
        $region66: #{classifier_forward.2} parent=51 // pred_check_branch
          %348 = sbr.rel (%p346) target = $region68
        $region67: #{classifier_forward.2} parent=51 // pred_region
          %349 = dma.done [#allocation8], 16
        $region68: #{classifier_forward.2} parent=51 // pred_fallthru
          _
        // Predicated region
        $region69: #{classifier_forward.2} parent=51 // pred_check
          %p350 = pneg %p175
        $region70: #{classifier_forward.2} parent=51 // pred_check_branch
          %352 = sbr.rel (%p350) target = $region72
        $region71: #{classifier_forward.2} parent=51 // pred_region
          %353 = dma.done [#allocation8], 512
        $region72: #{classifier_forward.2} parent=51 // pred_fallthru
          _
        // Predicated region
        $region73: #{classifier_forward.2} parent=51 // pred_check
          %p354 = pneg %p196
        $region74: #{classifier_forward.2} parent=51 // pred_check_branch
          %356 = sbr.rel (%p354) target = $region76
        $region75: #{classifier_forward.2} parent=51 // pred_region
          %357 = dma.done [#allocation11], 16
        $region76: #{classifier_forward.2} parent=51 // pred_fallthru
          _
        %p358 = scmp.lt.s32.totalorder %s23, 1
        %s359 = scalar_select %p358, %s23, 1
        %s360 = smul.addr %s359, 11
        %s361 = smul.addr %s360, 8
        %s362 = scalar_lea.vmem %s0, %s361
        %p363 = pneg %p44
        %p364 = pneg %p41
        %p365 = scmp.lt.s32.totalorder %s23, 1
        %s366 = scalar_select %p365, %s23, 1
        %s367 = smul.addr %s366, 11
        %s368 = smul.addr %s367, 8
        %s369 = scalar_lea.vmem %s1, %s368
        %p370 = pneg %p70
        %p371 = pneg %p67
        %p372 = pneg %p91
        %p373 = pneg %p88
        %p374 = pneg %p112
        %p375 = pneg %p109
        %p376 = pneg %p133
        %p377 = pneg %p130
        %p378 = pneg %p154
        %p379 = pneg %p151
        %p380 = pneg %p175
        %p381 = pneg %p172
        %p382 = pneg %p196
        %p383 = pneg %p193
        %p384 = pneg %p222
        %p385 = pneg %p219
        %p386 = scmp.lt.s32.totalorder %s23, 1
        %s387 = scalar_select %p386, %s23, 1
        %s388 = smul.addr %s387, 11
        %s389 = smul.addr %s388, 8
        %s390 = scalar_lea.vmem %s8, %s389
        %p391 = scmp.lt.s32.totalorder %s23, 1
        %s392 = scalar_select %p391, %s23, 1
        %s393 = smul.addr %s392, 11
        %s394 = smul.addr %s393, 8
        %s395 = scalar_lea.vmem %s0, %s394
        %p396 = scmp.lt.s32.totalorder %s23, 1
        %s397 = scalar_select %p396, %s23, 1
        %s398 = smul.addr %s397, 11
        %s399 = smul.addr %s398, 8
        %s400 = scalar_lea.vmem %s1, %s399
        %p401 = scmp.lt.s32.totalorder %s23, 1
        %s402 = scalar_select %p401, %s23, 1
        %s403 = smul.addr %s402, 11
        %s404 = smul.addr %s403, 8
        %s405 = scalar_lea.vmem %s8, %s404
        %v406 = vld [vmem:[%s395] sm:$0xff]
        %v407 = vld [vmem:[%s395 + $0x8] sm:$0xff]
        %v408 = vld [vmem:[%s395 + $0x10] sm:$0xff]
        %v409 = vld [vmem:[%s395 + $0x18] sm:$0xff]
        %v410 = vld [vmem:[%s395 + $0x20] sm:$0xff]
        %v411 = vld [vmem:[%s395 + $0x28] sm:$0xff]
        %v412 = vld [vmem:[%s395 + $0x30] sm:$0xff]
        %v413 = vld [vmem:[%s395 + $0x38] sm:$0xff]
        %v414 = vld [vmem:[%s395 + $0x40] sm:$0xff]
        %v415 = vld [vmem:[%s395 + $0x48] sm:$0xff]
        %v416 = vld [vmem:[%s395 + $0x50] sm:$0x3]
        %v417 = vld [vmem:[%s400] sm:$0xff]
        %v418 = vld [vmem:[%s400 + $0x8] sm:$0xff]
        %v419 = vld [vmem:[%s400 + $0x10] sm:$0xff]
        %v420 = vld [vmem:[%s400 + $0x18] sm:$0xff]
        %v421 = vld [vmem:[%s400 + $0x20] sm:$0xff]
        %v422 = vld [vmem:[%s400 + $0x28] sm:$0xff]
        %v423 = vld [vmem:[%s400 + $0x30] sm:$0xff]
        %v424 = vld [vmem:[%s400 + $0x38] sm:$0xff]
        %v425 = vld [vmem:[%s400 + $0x40] sm:$0xff]
        %v426 = vld [vmem:[%s400 + $0x48] sm:$0xff]
        %v427 = vld [vmem:[%s400 + $0x50] sm:$0x3]
        %v428 = vld [vmem:[#allocation2] sm:$0xf]
        %vm429 = vcmask 31744
        %v431 = vsel %vm429, %v417, 0
        %v434 = vsel %vm429, %v418, 0
        %v437 = vsel %vm429, %v419, 0
        %v440 = vsel %vm429, %v420, 0
        %v443 = vsel %vm429, %v421, 0
        %v446 = vsel %vm429, %v422, 0
        %v449 = vsel %vm429, %v423, 0
        %v452 = vsel %vm429, %v424, 0
        %v455 = vsel %vm429, %v425, 0
        %v458 = vsel %vm429, %v426, 0
        %v461 = vsel %vm429, %v427, 0
        %vm463 = vcmask 1043456
        %v465 = vsel %vm463, %v428, 0
        %467 = vmatprep.subr.mxu0 0.0
        %468 = vmatpush1.msra.mxu0 %v465
        %469 = vmatprep.subr.mxu0 0.0
        %470 = vmatpush1.msra.mxu0 0.0
        %471 = vmatprep.subr.mxu0 0.0
        %472 = vmatpush1.msra.mxu0 0.0
        %473 = vmatprep.subr.mxu0 0.0
        %474 = vmatpush1.msra.mxu0 0.0
        %475 = vmatprep.subr.mxu0 0.0
        %476 = vmatpush1.msra.mxu0 0.0
        %477 = vmatprep.subr.mxu0 0.0
        %478 = vmatpush1.msra.mxu0 0.0
        %479 = vmatprep.subr.mxu0 0.0
        %480 = vmatpush1.msra.mxu0 0.0
        %481 = vmatprep.subr.mxu0 0.0
        %482 = vmatpush1.msra.mxu0 0.0
        %483 = vmatprep.subr.mxu0 0.0
        %484 = vmatpush1.msra.mxu0 0.0
        %485 = vmatprep.subr.mxu0 0.0
        %486 = vmatpush1.msra.mxu0 0.0
        %487 = vmatprep.subr.mxu0 0.0
        %488 = vmatpush1.msra.mxu0 0.0
        %489 = vmatprep.subr.mxu0 0.0
        %490 = vmatpush1.msra.mxu0 0.0
        %491 = vmatprep.subr.mxu0 0.0
        %492 = vmatpush1.msra.mxu0 0.0
        %493 = vmatprep.subr.mxu0 0.0
        %494 = vmatpush1.msra.mxu0 0.0
        %495 = vmatprep.subr.mxu0 0.0
        %496 = vmatpush1.msra.mxu0 0.0
        %497 = vmatprep.subr.mxu0 0.0
        %498 = vmatpush1.msra.mxu0 0.0
        %499 = vmatprep.subr.mxu0 0.0
        %500 = vmatpush1.msra.mxu0 0.0
        %501 = vmatprep.subr.mxu0 0.0
        %502 = vmatpush1.msra.mxu0 0.0
        %503 = vmatprep.subr.mxu0 0.0
        %504 = vmatpush1.msra.mxu0 0.0
        %505 = vmatprep.subr.mxu0 0.0
        %506 = vmatpush1.msra.mxu0 0.0
        %507 = vmatprep.subr.mxu0 0.0
        %508 = vmatpush1.msra.mxu0 0.0
        %509 = vmatprep.subr.mxu0 0.0
        %510 = vmatpush1.msra.mxu0 0.0
        %511 = vmatprep.subr.mxu0 0.0
        %512 = vmatpush1.msra.mxu0 0.0
        %513 = vmatprep.subr.mxu0 0.0
        %514 = vmatpush1.msra.mxu0 0.0
        %515 = vmatprep.subr.mxu0 0.0
        %516 = vmatpush1.msra.mxu0 0.0
        %517 = vmatprep.subr.mxu0 0.0
        %518 = vmatpush1.msra.mxu0 0.0
        %519 = vmatprep.subr.mxu0 0.0
        %520 = vmatpush1.msra.mxu0 0.0
        %521 = vmatprep.subr.mxu0 0.0
        %522 = vmatpush1.msra.mxu0 0.0
        %523 = vmatprep.subr.mxu0 0.0
        %524 = vmatpush1.msra.mxu0 0.0
        %525 = vmatprep.subr.mxu0 0.0
        %526 = vmatpush1.msra.mxu0 0.0
        %527 = vmatprep.subr.mxu0 0.0
        %528 = vmatpush1.msra.mxu0 0.0
        %529 = vmatprep.subr.mxu0 0.0
        %530 = vmatpush1.msra.mxu0 0.0
        %531 = vmatprep.mubr.f32.mxu0 0.0
        %532 = vmatmul.mubr.f32.gmra.mrb[0].mxu0 %v431
        %v533 = vpop.f32.mrb[0].mxu0
        %v534 = vadd.f32 0.0, %v533
        %v535 = vpop.f32.mrb[0].mxu0
        %536 = vmatprep.mubr.f32.mxu0 0.0
        %537 = vmatmul.mubr.f32.gmra.mrb[0].mxu0 %v434
        %v538 = vpop.f32.mrb[0].mxu0
        %v539 = vadd.f32 0.0, %v538
        %v540 = vpop.f32.mrb[0].mxu0
        %541 = vmatprep.mubr.f32.mxu0 0.0
        %542 = vmatmul.mubr.f32.gmra.mrb[0].mxu0 %v437
        %v543 = vpop.f32.mrb[0].mxu0
        %v544 = vadd.f32 0.0, %v543
        %v545 = vpop.f32.mrb[0].mxu0
        %546 = vmatprep.mubr.f32.mxu0 0.0
        %547 = vmatmul.mubr.f32.gmra.mrb[0].mxu0 %v440
        %v548 = vpop.f32.mrb[0].mxu0
        %v549 = vadd.f32 0.0, %v548
        %v550 = vpop.f32.mrb[0].mxu0
        %551 = vmatprep.mubr.f32.mxu0 0.0
        %552 = vmatmul.mubr.f32.gmra.mrb[0].mxu0 %v443
        %v553 = vpop.f32.mrb[0].mxu0
        %v554 = vadd.f32 0.0, %v553
        %v555 = vpop.f32.mrb[0].mxu0
        %556 = vmatprep.mubr.f32.mxu0 0.0
        %557 = vmatmul.mubr.f32.gmra.mrb[0].mxu0 %v446
        %v558 = vpop.f32.mrb[0].mxu0
        %v559 = vadd.f32 0.0, %v558
        %v560 = vpop.f32.mrb[0].mxu0
        %561 = vmatprep.mubr.f32.mxu0 0.0
        %562 = vmatmul.mubr.f32.gmra.mrb[0].mxu0 %v449
        %v563 = vpop.f32.mrb[0].mxu0
        %v564 = vadd.f32 0.0, %v563
        %v565 = vpop.f32.mrb[0].mxu0
        %566 = vmatprep.mubr.f32.mxu0 0.0
        %567 = vmatmul.mubr.f32.gmra.mrb[0].mxu0 %v452
        %v568 = vpop.f32.mrb[0].mxu0
        %v569 = vadd.f32 0.0, %v568
        %v570 = vpop.f32.mrb[0].mxu0
        %571 = vmatprep.mubr.f32.mxu0 0.0
        %572 = vmatmul.mubr.f32.gmra.mrb[0].mxu0 %v455
        %v573 = vpop.f32.mrb[0].mxu0
        %v574 = vadd.f32 0.0, %v573
        %v575 = vpop.f32.mrb[0].mxu0
        %576 = vmatprep.mubr.f32.mxu0 0.0
        %577 = vmatmul.mubr.f32.gmra.mrb[0].mxu0 %v458
        %v578 = vpop.f32.mrb[0].mxu0
        %v579 = vadd.f32 0.0, %v578
        %v580 = vpop.f32.mrb[0].mxu0
        %581 = vmatprep.mubr.f32.mxu0 0.0
        %582 = vmatmul.mubr.f32.gmra.mrb[0].mxu0 %v461
        %v583 = vpop.f32.mrb[0].mxu0
        %v584 = vadd.f32 0.0, %v583
        %v585 = vpop.f32.mrb[0].mxu0
        %586 = vdwg.mxu0
        %v587 = vld [vmem:[#allocation4] sm:$0x1]
        %v589 = vlaneseq
        %v590 = vshrl.u32 %v589, 7
        %v591 = vsub.s32 0, %v590
        %v592 = vrot.slane %v587, %v591
        %vm594 = vcmask 670720
        %v596 = vsel %vm594, %v406, 0
        %v599 = vsel %vm594, %v407, 0
        %v602 = vsel %vm594, %v408, 0
        %v605 = vsel %vm594, %v409, 0
        %v608 = vsel %vm594, %v410, 0
        %v611 = vsel %vm594, %v411, 0
        %v614 = vsel %vm594, %v412, 0
        %v617 = vsel %vm594, %v413, 0
        %v620 = vsel %vm594, %v414, 0
        %v623 = vsel %vm594, %v415, 0
        %v626 = vsel %vm594, %v416, 0
        %vm628 = vcmask 1041408
        %v630 = vsel %vm628, %v584, 0
        %632 = vmatprep.subr.mxu0 0.0
        %633 = vmatpush1.msra.mxu0 %v534
        %634 = vmatprep.subr.mxu0 0.0
        %635 = vmatpush1.msra.mxu0 %v539
        %636 = vmatprep.subr.mxu0 0.0
        %637 = vmatpush1.msra.mxu0 %v544
        %638 = vmatprep.subr.mxu0 0.0
        %639 = vmatpush1.msra.mxu0 %v549
        %640 = vmatprep.subr.mxu0 0.0
        %641 = vmatpush1.msra.mxu0 %v554
        %642 = vmatprep.subr.mxu0 0.0
        %643 = vmatpush1.msra.mxu0 %v559
        %644 = vmatprep.subr.mxu0 0.0
        %645 = vmatpush1.msra.mxu0 %v564
        %646 = vmatprep.subr.mxu0 0.0
        %647 = vmatpush1.msra.mxu0 %v569
        %648 = vmatprep.subr.mxu0 0.0
        %649 = vmatpush1.msra.mxu0 %v574
        %650 = vmatprep.subr.mxu0 0.0
        %651 = vmatpush1.msra.mxu0 %v579
        %652 = vmatprep.subr.mxu0 0.0
        %653 = vmatpush1.msra.mxu0 %v630
        %654 = vmatprep.subr.mxu0 0.0
        %655 = vmatpush1.msra.mxu0 0.0
        %656 = vmatprep.subr.mxu0 0.0
        %657 = vmatpush1.msra.mxu0 0.0
        %658 = vmatprep.subr.mxu0 0.0
        %659 = vmatpush1.msra.mxu0 0.0
        %660 = vmatprep.subr.mxu0 0.0
        %661 = vmatpush1.msra.mxu0 0.0
        %662 = vmatprep.subr.mxu0 0.0
        %663 = vmatpush1.msra.mxu0 0.0
        %664 = vmatprep.subr.mxu0 0.0
        %665 = vmatpush1.msra.mxu0 0.0
        %666 = vmatprep.subr.mxu0 0.0
        %667 = vmatpush1.msra.mxu0 0.0
        %668 = vmatprep.subr.mxu0 0.0
        %669 = vmatpush1.msra.mxu0 0.0
        %670 = vmatprep.subr.mxu0 0.0
        %671 = vmatpush1.msra.mxu0 0.0
        %672 = vmatprep.subr.mxu0 0.0
        %673 = vmatpush1.msra.mxu0 0.0
        %674 = vmatprep.subr.mxu0 0.0
        %675 = vmatpush1.msra.mxu0 0.0
        %676 = vmatprep.subr.mxu0 0.0
        %677 = vmatpush1.msra.mxu0 0.0
        %678 = vmatprep.subr.mxu0 0.0
        %679 = vmatpush1.msra.mxu0 0.0
        %680 = vmatprep.subr.mxu0 0.0
        %681 = vmatpush1.msra.mxu0 0.0
        %682 = vmatprep.subr.mxu0 0.0
        %683 = vmatpush1.msra.mxu0 0.0
        %684 = vmatprep.subr.mxu0 0.0
        %685 = vmatpush1.msra.mxu0 0.0
        %686 = vmatprep.subr.mxu0 0.0
        %687 = vmatpush1.msra.mxu0 0.0
        %688 = vmatprep.subr.mxu0 0.0
        %689 = vmatpush1.msra.mxu0 0.0
        %690 = vmatprep.subr.mxu0 0.0
        %691 = vmatpush1.msra.mxu0 0.0
        %692 = vmatprep.subr.mxu0 0.0
        %693 = vmatpush1.msra.mxu0 0.0
        %694 = vmatprep.subr.mxu0 0.0
        %695 = vmatpush1.msra.mxu0 0.0
        %696 = vmatprep.mubr.f32.mxu0 0.0
        %697 = vmatmul.mubr.f32.gmra.mrb[0].mxu0 %v596
        %v698 = vpop.f32.mrb[0].mxu0
        %v699 = vadd.f32 %v592, %v698
        %v700 = vpop.f32.mrb[0].mxu0
        %701 = vmatprep.mubr.f32.mxu0 0.0
        %702 = vmatmul.mubr.f32.gmra.mrb[0].mxu0 %v599
        %v703 = vpop.f32.mrb[0].mxu0
        %v704 = vadd.f32 %v592, %v703
        %v705 = vpop.f32.mrb[0].mxu0
        %706 = vmatprep.mubr.f32.mxu0 0.0
        %707 = vmatmul.mubr.f32.gmra.mrb[0].mxu0 %v602
        %v708 = vpop.f32.mrb[0].mxu0
        %v709 = vadd.f32 %v592, %v708
        %v710 = vpop.f32.mrb[0].mxu0
        %711 = vmatprep.mubr.f32.mxu0 0.0
        %712 = vmatmul.mubr.f32.gmra.mrb[0].mxu0 %v605
        %v713 = vpop.f32.mrb[0].mxu0
        %v714 = vadd.f32 %v592, %v713
        %v715 = vpop.f32.mrb[0].mxu0
        %716 = vmatprep.mubr.f32.mxu0 0.0
        %717 = vmatmul.mubr.f32.gmra.mrb[0].mxu0 %v608
        %v718 = vpop.f32.mrb[0].mxu0
        %v719 = vadd.f32 %v592, %v718
        %v720 = vpop.f32.mrb[0].mxu0
        %721 = vmatprep.mubr.f32.mxu0 0.0
        %722 = vmatmul.mubr.f32.gmra.mrb[0].mxu0 %v611
        %v723 = vpop.f32.mrb[0].mxu0
        %v724 = vadd.f32 %v592, %v723
        %v725 = vpop.f32.mrb[0].mxu0
        %726 = vmatprep.mubr.f32.mxu0 0.0
        %727 = vmatmul.mubr.f32.gmra.mrb[0].mxu0 %v614
        %v728 = vpop.f32.mrb[0].mxu0
        %v729 = vadd.f32 %v592, %v728
        %v730 = vpop.f32.mrb[0].mxu0
        %731 = vmatprep.mubr.f32.mxu0 0.0
        %732 = vmatmul.mubr.f32.gmra.mrb[0].mxu0 %v617
        %v733 = vpop.f32.mrb[0].mxu0
        %v734 = vadd.f32 %v592, %v733
        %v735 = vpop.f32.mrb[0].mxu0
        %736 = vmatprep.mubr.f32.mxu0 0.0
        %737 = vmatmul.mubr.f32.gmra.mrb[0].mxu0 %v620
        %v738 = vpop.f32.mrb[0].mxu0
        %v739 = vadd.f32 %v592, %v738
        %v740 = vpop.f32.mrb[0].mxu0
        %741 = vmatprep.mubr.f32.mxu0 0.0
        %742 = vmatmul.mubr.f32.gmra.mrb[0].mxu0 %v623
        %v743 = vpop.f32.mrb[0].mxu0
        %v744 = vadd.f32 %v592, %v743
        %v745 = vpop.f32.mrb[0].mxu0
        %746 = vmatprep.mubr.f32.mxu0 0.0
        %747 = vmatmul.mubr.f32.gmra.mrb[0].mxu0 %v626
        %v748 = vpop.f32.mrb[0].mxu0
        %v749 = vadd.f32 %v592, %v748
        %v750 = vpop.f32.mrb[0].mxu0
        %751 = vdwg.mxu0
        %v752 = vmax.f32 %v699, 0.0
        %v753 = vmax.f32 %v704, 0.0
        %v754 = vmax.f32 %v709, 0.0
        %v755 = vmax.f32 %v714, 0.0
        %v756 = vmax.f32 %v719, 0.0
        %v757 = vmax.f32 %v724, 0.0
        %v758 = vmax.f32 %v729, 0.0
        %v759 = vmax.f32 %v734, 0.0
        %v760 = vmax.f32 %v739, 0.0
        %v761 = vmax.f32 %v744, 0.0
        %v762 = vmax.f32 %v749, 0.0
        %v763 = vld [vmem:[#allocation6] sm:$0xff]
        %v764 = vld [vmem:[#allocation6 + $0x8] sm:$0xff]
        %v765 = vld [vmem:[#allocation6 + $0x10] sm:$0xff]
        %v766 = vld [vmem:[#allocation6 + $0x18] sm:$0xff]
        %vm767 = vcmask 261120
        %v769 = vsel %vm767, %v752, 0
        %v772 = vsel %vm767, %v753, 0
        %v775 = vsel %vm767, %v754, 0
        %v778 = vsel %vm767, %v755, 0
        %v781 = vsel %vm767, %v756, 0
        %v784 = vsel %vm767, %v757, 0
        %v787 = vsel %vm767, %v758, 0
        %v790 = vsel %vm767, %v759, 0
        %v793 = vsel %vm767, %v760, 0
        %v796 = vsel %vm767, %v761, 0
        %v799 = vsel %vm767, %v762, 0
        %801 = vmatprep.subr.mxu0 0.0
        %802 = vmatpush1.msra.mxu0 %v763
        %803 = vmatprep.subr.mxu0 0.0
        %804 = vmatpush1.msra.mxu0 %v764
        %805 = vmatprep.subr.mxu0 0.0
        %806 = vmatpush1.msra.mxu0 %v765
        %807 = vmatprep.subr.mxu0 0.0
        %808 = vmatpush1.msra.mxu0 %v766
        %809 = vmatprep.subr.mxu0 0.0
        %810 = vmatpush1.msra.mxu0 0.0
        %811 = vmatprep.subr.mxu0 0.0
        %812 = vmatpush1.msra.mxu0 0.0
        %813 = vmatprep.subr.mxu0 0.0
        %814 = vmatpush1.msra.mxu0 0.0
        %815 = vmatprep.subr.mxu0 0.0
        %816 = vmatpush1.msra.mxu0 0.0
        %817 = vmatprep.subr.mxu0 0.0
        %818 = vmatpush1.msra.mxu0 0.0
        %819 = vmatprep.subr.mxu0 0.0
        %820 = vmatpush1.msra.mxu0 0.0
        %821 = vmatprep.subr.mxu0 0.0
        %822 = vmatpush1.msra.mxu0 0.0
        %823 = vmatprep.subr.mxu0 0.0
        %824 = vmatpush1.msra.mxu0 0.0
        %825 = vmatprep.subr.mxu0 0.0
        %826 = vmatpush1.msra.mxu0 0.0
        %827 = vmatprep.subr.mxu0 0.0
        %828 = vmatpush1.msra.mxu0 0.0
        %829 = vmatprep.subr.mxu0 0.0
        %830 = vmatpush1.msra.mxu0 0.0
        %831 = vmatprep.subr.mxu0 0.0
        %832 = vmatpush1.msra.mxu0 0.0
        %833 = vmatprep.subr.mxu0 0.0
        %834 = vmatpush1.msra.mxu0 0.0
        %835 = vmatprep.subr.mxu0 0.0
        %836 = vmatpush1.msra.mxu0 0.0
        %837 = vmatprep.subr.mxu0 0.0
        %838 = vmatpush1.msra.mxu0 0.0
        %839 = vmatprep.subr.mxu0 0.0
        %840 = vmatpush1.msra.mxu0 0.0
        %841 = vmatprep.subr.mxu0 0.0
        %842 = vmatpush1.msra.mxu0 0.0
        %843 = vmatprep.subr.mxu0 0.0
        %844 = vmatpush1.msra.mxu0 0.0
        %845 = vmatprep.subr.mxu0 0.0
        %846 = vmatpush1.msra.mxu0 0.0
        %847 = vmatprep.subr.mxu0 0.0
        %848 = vmatpush1.msra.mxu0 0.0
        %849 = vmatprep.subr.mxu0 0.0
        %850 = vmatpush1.msra.mxu0 0.0
        %851 = vmatprep.subr.mxu0 0.0
        %852 = vmatpush1.msra.mxu0 0.0
        %853 = vmatprep.subr.mxu0 0.0
        %854 = vmatpush1.msra.mxu0 0.0
        %855 = vmatprep.subr.mxu0 0.0
        %856 = vmatpush1.msra.mxu0 0.0
        %857 = vmatprep.subr.mxu0 0.0
        %858 = vmatpush1.msra.mxu0 0.0
        %859 = vmatprep.subr.mxu0 0.0
        %860 = vmatpush1.msra.mxu0 0.0
        %861 = vmatprep.subr.mxu0 0.0
        %862 = vmatpush1.msra.mxu0 0.0
        %863 = vmatprep.subr.mxu0 0.0
        %864 = vmatpush1.msra.mxu0 0.0
        %865 = vmatprep.mubr.f32.mxu0 0.0
        %866 = vmatmul.mubr.f32.gmra.mrb[0].mxu0 %v769
        %v867 = vpop.f32.mrb[0].mxu0
        %v868 = vadd.f32 0.0, %v867
        %v869 = vpop.f32.mrb[0].mxu0
        %870 = vmatprep.mubr.f32.mxu0 0.0
        %871 = vmatmul.mubr.f32.gmra.mrb[0].mxu0 %v772
        %v872 = vpop.f32.mrb[0].mxu0
        %v873 = vadd.f32 0.0, %v872
        %v874 = vpop.f32.mrb[0].mxu0
        %875 = vmatprep.mubr.f32.mxu0 0.0
        %876 = vmatmul.mubr.f32.gmra.mrb[0].mxu0 %v775
        %v877 = vpop.f32.mrb[0].mxu0
        %v878 = vadd.f32 0.0, %v877
        %v879 = vpop.f32.mrb[0].mxu0
        %880 = vmatprep.mubr.f32.mxu0 0.0
        %881 = vmatmul.mubr.f32.gmra.mrb[0].mxu0 %v778
        %v882 = vpop.f32.mrb[0].mxu0
        %v883 = vadd.f32 0.0, %v882
        %v884 = vpop.f32.mrb[0].mxu0
        %885 = vmatprep.mubr.f32.mxu0 0.0
        %886 = vmatmul.mubr.f32.gmra.mrb[0].mxu0 %v781
        %v887 = vpop.f32.mrb[0].mxu0
        %v888 = vadd.f32 0.0, %v887
        %v889 = vpop.f32.mrb[0].mxu0
        %890 = vmatprep.mubr.f32.mxu0 0.0
        %891 = vmatmul.mubr.f32.gmra.mrb[0].mxu0 %v784
        %v892 = vpop.f32.mrb[0].mxu0
        %v893 = vadd.f32 0.0, %v892
        %v894 = vpop.f32.mrb[0].mxu0
        %895 = vmatprep.mubr.f32.mxu0 0.0
        %896 = vmatmul.mubr.f32.gmra.mrb[0].mxu0 %v787
        %v897 = vpop.f32.mrb[0].mxu0
        %v898 = vadd.f32 0.0, %v897
        %v899 = vpop.f32.mrb[0].mxu0
        %900 = vmatprep.mubr.f32.mxu0 0.0
        %901 = vmatmul.mubr.f32.gmra.mrb[0].mxu0 %v790
        %v902 = vpop.f32.mrb[0].mxu0
        %v903 = vadd.f32 0.0, %v902
        %v904 = vpop.f32.mrb[0].mxu0
        %905 = vmatprep.mubr.f32.mxu0 0.0
        %906 = vmatmul.mubr.f32.gmra.mrb[0].mxu0 %v793
        %v907 = vpop.f32.mrb[0].mxu0
        %v908 = vadd.f32 0.0, %v907
        %v909 = vpop.f32.mrb[0].mxu0
        %910 = vmatprep.mubr.f32.mxu0 0.0
        %911 = vmatmul.mubr.f32.gmra.mrb[0].mxu0 %v796
        %v912 = vpop.f32.mrb[0].mxu0
        %v913 = vadd.f32 0.0, %v912
        %v914 = vpop.f32.mrb[0].mxu0
        %915 = vmatprep.mubr.f32.mxu0 0.0
        %916 = vmatmul.mubr.f32.gmra.mrb[0].mxu0 %v799
        %v917 = vpop.f32.mrb[0].mxu0
        %v918 = vadd.f32 0.0, %v917
        %v919 = vpop.f32.mrb[0].mxu0
        %920 = vdwg.mxu0
        %v921 = vld [vmem:[#allocation7] sm:$0x1]
        %v923 = vlaneseq
        %v924 = vshrl.u32 %v923, 7
        %v925 = vsub.s32 0, %v924
        %v926 = vrot.slane %v921, %v925
        %v929 = vsel %vm628, %v918, 0
        %931 = vmatprep.subr.mxu0 0.0
        %932 = vmatpush1.msra.mxu0 %v868
        %933 = vmatprep.subr.mxu0 0.0
        %934 = vmatpush1.msra.mxu0 %v873
        %935 = vmatprep.subr.mxu0 0.0
        %936 = vmatpush1.msra.mxu0 %v878
        %937 = vmatprep.subr.mxu0 0.0
        %938 = vmatpush1.msra.mxu0 %v883
        %939 = vmatprep.subr.mxu0 0.0
        %940 = vmatpush1.msra.mxu0 %v888
        %941 = vmatprep.subr.mxu0 0.0
        %942 = vmatpush1.msra.mxu0 %v893
        %943 = vmatprep.subr.mxu0 0.0
        %944 = vmatpush1.msra.mxu0 %v898
        %945 = vmatprep.subr.mxu0 0.0
        %946 = vmatpush1.msra.mxu0 %v903
        %947 = vmatprep.subr.mxu0 0.0
        %948 = vmatpush1.msra.mxu0 %v908
        %949 = vmatprep.subr.mxu0 0.0
        %950 = vmatpush1.msra.mxu0 %v913
        %951 = vmatprep.subr.mxu0 0.0
        %952 = vmatpush1.msra.mxu0 %v929
        %953 = vmatprep.subr.mxu0 0.0
        %954 = vmatpush1.msra.mxu0 0.0
        %955 = vmatprep.subr.mxu0 0.0
        %956 = vmatpush1.msra.mxu0 0.0
        %957 = vmatprep.subr.mxu0 0.0
        %958 = vmatpush1.msra.mxu0 0.0
        %959 = vmatprep.subr.mxu0 0.0
        %960 = vmatpush1.msra.mxu0 0.0
        %961 = vmatprep.subr.mxu0 0.0
        %962 = vmatpush1.msra.mxu0 0.0
        %963 = vmatprep.subr.mxu0 0.0
        %964 = vmatpush1.msra.mxu0 0.0
        %965 = vmatprep.subr.mxu0 0.0
        %966 = vmatpush1.msra.mxu0 0.0
        %967 = vmatprep.subr.mxu0 0.0
        %968 = vmatpush1.msra.mxu0 0.0
        %969 = vmatprep.subr.mxu0 0.0
        %970 = vmatpush1.msra.mxu0 0.0
        %971 = vmatprep.subr.mxu0 0.0
        %972 = vmatpush1.msra.mxu0 0.0
        %973 = vmatprep.subr.mxu0 0.0
        %974 = vmatpush1.msra.mxu0 0.0
        %975 = vmatprep.subr.mxu0 0.0
        %976 = vmatpush1.msra.mxu0 0.0
        %977 = vmatprep.subr.mxu0 0.0
        %978 = vmatpush1.msra.mxu0 0.0
        %979 = vmatprep.subr.mxu0 0.0
        %980 = vmatpush1.msra.mxu0 0.0
        %981 = vmatprep.subr.mxu0 0.0
        %982 = vmatpush1.msra.mxu0 0.0
        %983 = vmatprep.subr.mxu0 0.0
        %984 = vmatpush1.msra.mxu0 0.0
        %985 = vmatprep.subr.mxu0 0.0
        %986 = vmatpush1.msra.mxu0 0.0
        %987 = vmatprep.subr.mxu0 0.0
        %988 = vmatpush1.msra.mxu0 0.0
        %989 = vmatprep.subr.mxu0 0.0
        %990 = vmatpush1.msra.mxu0 0.0
        %991 = vmatprep.subr.mxu0 0.0
        %992 = vmatpush1.msra.mxu0 0.0
        %993 = vmatprep.subr.mxu0 0.0
        %994 = vmatpush1.msra.mxu0 0.0
        %995 = vmatprep.mubr.f32.mxu0 0.0
        %996 = vmatmul.mubr.f32.gmra.mrb[0].mxu0 %v596
        %v997 = vpop.f32.mrb[0].mxu0
        %v998 = vadd.f32 %v926, %v997
        %v999 = vpop.f32.mrb[0].mxu0
        %1000 = vmatprep.mubr.f32.mxu0 0.0
        %1001 = vmatmul.mubr.f32.gmra.mrb[0].mxu0 %v599
        %v1002 = vpop.f32.mrb[0].mxu0
        %v1003 = vadd.f32 %v926, %v1002
        %v1004 = vpop.f32.mrb[0].mxu0
        %1005 = vmatprep.mubr.f32.mxu0 0.0
        %1006 = vmatmul.mubr.f32.gmra.mrb[0].mxu0 %v602
        %v1007 = vpop.f32.mrb[0].mxu0
        %v1008 = vadd.f32 %v926, %v1007
        %v1009 = vpop.f32.mrb[0].mxu0
        %1010 = vmatprep.mubr.f32.mxu0 0.0
        %1011 = vmatmul.mubr.f32.gmra.mrb[0].mxu0 %v605
        %v1012 = vpop.f32.mrb[0].mxu0
        %v1013 = vadd.f32 %v926, %v1012
        %v1014 = vpop.f32.mrb[0].mxu0
        %1015 = vmatprep.mubr.f32.mxu0 0.0
        %1016 = vmatmul.mubr.f32.gmra.mrb[0].mxu0 %v608
        %v1017 = vpop.f32.mrb[0].mxu0
        %v1018 = vadd.f32 %v926, %v1017
        %v1019 = vpop.f32.mrb[0].mxu0
        %1020 = vmatprep.mubr.f32.mxu0 0.0
        %1021 = vmatmul.mubr.f32.gmra.mrb[0].mxu0 %v611
        %v1022 = vpop.f32.mrb[0].mxu0
        %v1023 = vadd.f32 %v926, %v1022
        %v1024 = vpop.f32.mrb[0].mxu0
        %1025 = vmatprep.mubr.f32.mxu0 0.0
        %1026 = vmatmul.mubr.f32.gmra.mrb[0].mxu0 %v614
        %v1027 = vpop.f32.mrb[0].mxu0
        %v1028 = vadd.f32 %v926, %v1027
        %v1029 = vpop.f32.mrb[0].mxu0
        %1030 = vmatprep.mubr.f32.mxu0 0.0
        %1031 = vmatmul.mubr.f32.gmra.mrb[0].mxu0 %v617
        %v1032 = vpop.f32.mrb[0].mxu0
        %v1033 = vadd.f32 %v926, %v1032
        %v1034 = vpop.f32.mrb[0].mxu0
        %1035 = vmatprep.mubr.f32.mxu0 0.0
        %1036 = vmatmul.mubr.f32.gmra.mrb[0].mxu0 %v620
        %v1037 = vpop.f32.mrb[0].mxu0
        %v1038 = vadd.f32 %v926, %v1037
        %v1039 = vpop.f32.mrb[0].mxu0
        %1040 = vmatprep.mubr.f32.mxu0 0.0
        %1041 = vmatmul.mubr.f32.gmra.mrb[0].mxu0 %v623
        %v1042 = vpop.f32.mrb[0].mxu0
        %v1043 = vadd.f32 %v926, %v1042
        %v1044 = vpop.f32.mrb[0].mxu0
        %1045 = vmatprep.mubr.f32.mxu0 0.0
        %1046 = vmatmul.mubr.f32.gmra.mrb[0].mxu0 %v626
        %v1047 = vpop.f32.mrb[0].mxu0
        %v1048 = vadd.f32 %v926, %v1047
        %v1049 = vpop.f32.mrb[0].mxu0
        %1050 = vdwg.mxu0
        %v1051 = vmax.f32 %v998, 0.0
        %v1052 = vmax.f32 %v1003, 0.0
        %v1053 = vmax.f32 %v1008, 0.0
        %v1054 = vmax.f32 %v1013, 0.0
        %v1055 = vmax.f32 %v1018, 0.0
        %v1056 = vmax.f32 %v1023, 0.0
        %v1057 = vmax.f32 %v1028, 0.0
        %v1058 = vmax.f32 %v1033, 0.0
        %v1059 = vmax.f32 %v1038, 0.0
        %v1060 = vmax.f32 %v1043, 0.0
        %v1061 = vmax.f32 %v1048, 0.0
        %v1062 = vld [vmem:[#allocation9] sm:$0xff]
        %v1063 = vld [vmem:[#allocation9 + $0x8] sm:$0xff]
        %v1064 = vld [vmem:[#allocation9 + $0x10] sm:$0xff]
        %v1065 = vld [vmem:[#allocation9 + $0x18] sm:$0xff]
        %v1067 = vsel %vm767, %v1051, 0
        %v1070 = vsel %vm767, %v1052, 0
        %v1073 = vsel %vm767, %v1053, 0
        %v1076 = vsel %vm767, %v1054, 0
        %v1079 = vsel %vm767, %v1055, 0
        %v1082 = vsel %vm767, %v1056, 0
        %v1085 = vsel %vm767, %v1057, 0
        %v1088 = vsel %vm767, %v1058, 0
        %v1091 = vsel %vm767, %v1059, 0
        %v1094 = vsel %vm767, %v1060, 0
        %v1097 = vsel %vm767, %v1061, 0
        %1099 = vmatprep.subr.mxu0 0.0
        %1100 = vmatpush1.msra.mxu0 %v1062
        %1101 = vmatprep.subr.mxu0 0.0
        %1102 = vmatpush1.msra.mxu0 %v1063
        %1103 = vmatprep.subr.mxu0 0.0
        %1104 = vmatpush1.msra.mxu0 %v1064
        %1105 = vmatprep.subr.mxu0 0.0
        %1106 = vmatpush1.msra.mxu0 %v1065
        %1107 = vmatprep.subr.mxu0 0.0
        %1108 = vmatpush1.msra.mxu0 0.0
        %1109 = vmatprep.subr.mxu0 0.0
        %1110 = vmatpush1.msra.mxu0 0.0
        %1111 = vmatprep.subr.mxu0 0.0
        %1112 = vmatpush1.msra.mxu0 0.0
        %1113 = vmatprep.subr.mxu0 0.0
        %1114 = vmatpush1.msra.mxu0 0.0
        %1115 = vmatprep.subr.mxu0 0.0
        %1116 = vmatpush1.msra.mxu0 0.0
        %1117 = vmatprep.subr.mxu0 0.0
        %1118 = vmatpush1.msra.mxu0 0.0
        %1119 = vmatprep.subr.mxu0 0.0
        %1120 = vmatpush1.msra.mxu0 0.0
        %1121 = vmatprep.subr.mxu0 0.0
        %1122 = vmatpush1.msra.mxu0 0.0
        %1123 = vmatprep.subr.mxu0 0.0
        %1124 = vmatpush1.msra.mxu0 0.0
        %1125 = vmatprep.subr.mxu0 0.0
        %1126 = vmatpush1.msra.mxu0 0.0
        %1127 = vmatprep.subr.mxu0 0.0
        %1128 = vmatpush1.msra.mxu0 0.0
        %1129 = vmatprep.subr.mxu0 0.0
        %1130 = vmatpush1.msra.mxu0 0.0
        %1131 = vmatprep.subr.mxu0 0.0
        %1132 = vmatpush1.msra.mxu0 0.0
        %1133 = vmatprep.subr.mxu0 0.0
        %1134 = vmatpush1.msra.mxu0 0.0
        %1135 = vmatprep.subr.mxu0 0.0
        %1136 = vmatpush1.msra.mxu0 0.0
        %1137 = vmatprep.subr.mxu0 0.0
        %1138 = vmatpush1.msra.mxu0 0.0
        %1139 = vmatprep.subr.mxu0 0.0
        %1140 = vmatpush1.msra.mxu0 0.0
        %1141 = vmatprep.subr.mxu0 0.0
        %1142 = vmatpush1.msra.mxu0 0.0
        %1143 = vmatprep.subr.mxu0 0.0
        %1144 = vmatpush1.msra.mxu0 0.0
        %1145 = vmatprep.subr.mxu0 0.0
        %1146 = vmatpush1.msra.mxu0 0.0
        %1147 = vmatprep.subr.mxu0 0.0
        %1148 = vmatpush1.msra.mxu0 0.0
        %1149 = vmatprep.subr.mxu0 0.0
        %1150 = vmatpush1.msra.mxu0 0.0
        %1151 = vmatprep.subr.mxu0 0.0
        %1152 = vmatpush1.msra.mxu0 0.0
        %1153 = vmatprep.subr.mxu0 0.0
        %1154 = vmatpush1.msra.mxu0 0.0
        %1155 = vmatprep.subr.mxu0 0.0
        %1156 = vmatpush1.msra.mxu0 0.0
        %1157 = vmatprep.subr.mxu0 0.0
        %1158 = vmatpush1.msra.mxu0 0.0
        %1159 = vmatprep.subr.mxu0 0.0
        %1160 = vmatpush1.msra.mxu0 0.0
        %1161 = vmatprep.subr.mxu0 0.0
        %1162 = vmatpush1.msra.mxu0 0.0
        %1163 = vmatprep.mubr.f32.mxu0 0.0
        %1164 = vmatmul.mubr.f32.gmra.mrb[0].mxu0 %v1067
        %v1165 = vpop.f32.mrb[0].mxu0
        %v1166 = vadd.f32 0.0, %v1165
        %v1167 = vpop.f32.mrb[0].mxu0
        %1168 = vmatprep.mubr.f32.mxu0 0.0
        %1169 = vmatmul.mubr.f32.gmra.mrb[0].mxu0 %v1070
        %v1170 = vpop.f32.mrb[0].mxu0
        %v1171 = vadd.f32 0.0, %v1170
        %v1172 = vpop.f32.mrb[0].mxu0
        %1173 = vmatprep.mubr.f32.mxu0 0.0
        %1174 = vmatmul.mubr.f32.gmra.mrb[0].mxu0 %v1073
        %v1175 = vpop.f32.mrb[0].mxu0
        %v1176 = vadd.f32 0.0, %v1175
        %v1177 = vpop.f32.mrb[0].mxu0
        %1178 = vmatprep.mubr.f32.mxu0 0.0
        %1179 = vmatmul.mubr.f32.gmra.mrb[0].mxu0 %v1076
        %v1180 = vpop.f32.mrb[0].mxu0
        %v1181 = vadd.f32 0.0, %v1180
        %v1182 = vpop.f32.mrb[0].mxu0
        %1183 = vmatprep.mubr.f32.mxu0 0.0
        %1184 = vmatmul.mubr.f32.gmra.mrb[0].mxu0 %v1079
        %v1185 = vpop.f32.mrb[0].mxu0
        %v1186 = vadd.f32 0.0, %v1185
        %v1187 = vpop.f32.mrb[0].mxu0
        %1188 = vmatprep.mubr.f32.mxu0 0.0
        %1189 = vmatmul.mubr.f32.gmra.mrb[0].mxu0 %v1082
        %v1190 = vpop.f32.mrb[0].mxu0
        %v1191 = vadd.f32 0.0, %v1190
        %v1192 = vpop.f32.mrb[0].mxu0
        %1193 = vmatprep.mubr.f32.mxu0 0.0
        %1194 = vmatmul.mubr.f32.gmra.mrb[0].mxu0 %v1085
        %v1195 = vpop.f32.mrb[0].mxu0
        %v1196 = vadd.f32 0.0, %v1195
        %v1197 = vpop.f32.mrb[0].mxu0
        %1198 = vmatprep.mubr.f32.mxu0 0.0
        %1199 = vmatmul.mubr.f32.gmra.mrb[0].mxu0 %v1088
        %v1200 = vpop.f32.mrb[0].mxu0
        %v1201 = vadd.f32 0.0, %v1200
        %v1202 = vpop.f32.mrb[0].mxu0
        %1203 = vmatprep.mubr.f32.mxu0 0.0
        %1204 = vmatmul.mubr.f32.gmra.mrb[0].mxu0 %v1091
        %v1205 = vpop.f32.mrb[0].mxu0
        %v1206 = vadd.f32 0.0, %v1205
        %v1207 = vpop.f32.mrb[0].mxu0
        %1208 = vmatprep.mubr.f32.mxu0 0.0
        %1209 = vmatmul.mubr.f32.gmra.mrb[0].mxu0 %v1094
        %v1210 = vpop.f32.mrb[0].mxu0
        %v1211 = vadd.f32 0.0, %v1210
        %v1212 = vpop.f32.mrb[0].mxu0
        %1213 = vmatprep.mubr.f32.mxu0 0.0
        %1214 = vmatmul.mubr.f32.gmra.mrb[0].mxu0 %v1097
        %v1215 = vpop.f32.mrb[0].mxu0
        %v1216 = vadd.f32 0.0, %v1215
        %v1217 = vpop.f32.mrb[0].mxu0
        %1218 = vdwg.mxu0
        %v1219 = vld [vmem:[#allocation10] sm:$0x1]
        %v1221 = vlaneseq
        %v1222 = vshrl.u32 %v1221, 7
        %v1223 = vsub.s32 0, %v1222
        %v1224 = vrot.slane %v1219, %v1223
        %v1227 = vsel %vm628, %v1216, 0
        %1229 = vmatprep.subr.mxu0 0.0
        %1230 = vmatpush1.msra.mxu0 %v1166
        %1231 = vmatprep.subr.mxu0 0.0
        %1232 = vmatpush1.msra.mxu0 %v1171
        %1233 = vmatprep.subr.mxu0 0.0
        %1234 = vmatpush1.msra.mxu0 %v1176
        %1235 = vmatprep.subr.mxu0 0.0
        %1236 = vmatpush1.msra.mxu0 %v1181
        %1237 = vmatprep.subr.mxu0 0.0
        %1238 = vmatpush1.msra.mxu0 %v1186
        %1239 = vmatprep.subr.mxu0 0.0
        %1240 = vmatpush1.msra.mxu0 %v1191
        %1241 = vmatprep.subr.mxu0 0.0
        %1242 = vmatpush1.msra.mxu0 %v1196
        %1243 = vmatprep.subr.mxu0 0.0
        %1244 = vmatpush1.msra.mxu0 %v1201
        %1245 = vmatprep.subr.mxu0 0.0
        %1246 = vmatpush1.msra.mxu0 %v1206
        %1247 = vmatprep.subr.mxu0 0.0
        %1248 = vmatpush1.msra.mxu0 %v1211
        %1249 = vmatprep.subr.mxu0 0.0
        %1250 = vmatpush1.msra.mxu0 %v1227
        %1251 = vmatprep.subr.mxu0 0.0
        %1252 = vmatpush1.msra.mxu0 0.0
        %1253 = vmatprep.subr.mxu0 0.0
        %1254 = vmatpush1.msra.mxu0 0.0
        %1255 = vmatprep.subr.mxu0 0.0
        %1256 = vmatpush1.msra.mxu0 0.0
        %1257 = vmatprep.subr.mxu0 0.0
        %1258 = vmatpush1.msra.mxu0 0.0
        %1259 = vmatprep.subr.mxu0 0.0
        %1260 = vmatpush1.msra.mxu0 0.0
        %1261 = vmatprep.subr.mxu0 0.0
        %1262 = vmatpush1.msra.mxu0 0.0
        %1263 = vmatprep.subr.mxu0 0.0
        %1264 = vmatpush1.msra.mxu0 0.0
        %1265 = vmatprep.subr.mxu0 0.0
        %1266 = vmatpush1.msra.mxu0 0.0
        %1267 = vmatprep.subr.mxu0 0.0
        %1268 = vmatpush1.msra.mxu0 0.0
        %1269 = vmatprep.subr.mxu0 0.0
        %1270 = vmatpush1.msra.mxu0 0.0
        %1271 = vmatprep.subr.mxu0 0.0
        %1272 = vmatpush1.msra.mxu0 0.0
        %1273 = vmatprep.subr.mxu0 0.0
        %1274 = vmatpush1.msra.mxu0 0.0
        %1275 = vmatprep.subr.mxu0 0.0
        %1276 = vmatpush1.msra.mxu0 0.0
        %1277 = vmatprep.subr.mxu0 0.0
        %1278 = vmatpush1.msra.mxu0 0.0
        %1279 = vmatprep.subr.mxu0 0.0
        %1280 = vmatpush1.msra.mxu0 0.0
        %1281 = vmatprep.subr.mxu0 0.0
        %1282 = vmatpush1.msra.mxu0 0.0
        %1283 = vmatprep.subr.mxu0 0.0
        %1284 = vmatpush1.msra.mxu0 0.0
        %1285 = vmatprep.subr.mxu0 0.0
        %1286 = vmatpush1.msra.mxu0 0.0
        %1287 = vmatprep.subr.mxu0 0.0
        %1288 = vmatpush1.msra.mxu0 0.0
        %1289 = vmatprep.subr.mxu0 0.0
        %1290 = vmatpush1.msra.mxu0 0.0
        %1291 = vmatprep.subr.mxu0 0.0
        %1292 = vmatpush1.msra.mxu0 0.0
        %1293 = vmatprep.mubr.f32.mxu0 0.0
        %1294 = vmatmul.mubr.f32.gmra.mrb[0].mxu0 %v596
        %v1295 = vpop.f32.mrb[0].mxu0
        %v1296 = vadd.f32 %v1224, %v1295
        %v1297 = vpop.f32.mrb[0].mxu0
        %1298 = vmatprep.mubr.f32.mxu0 0.0
        %1299 = vmatmul.mubr.f32.gmra.mrb[0].mxu0 %v599
        %v1300 = vpop.f32.mrb[0].mxu0
        %v1301 = vadd.f32 %v1224, %v1300
        %v1302 = vpop.f32.mrb[0].mxu0
        %1303 = vmatprep.mubr.f32.mxu0 0.0
        %1304 = vmatmul.mubr.f32.gmra.mrb[0].mxu0 %v602
        %v1305 = vpop.f32.mrb[0].mxu0
        %v1306 = vadd.f32 %v1224, %v1305
        %v1307 = vpop.f32.mrb[0].mxu0
        %1308 = vmatprep.mubr.f32.mxu0 0.0
        %1309 = vmatmul.mubr.f32.gmra.mrb[0].mxu0 %v605
        %v1310 = vpop.f32.mrb[0].mxu0
        %v1311 = vadd.f32 %v1224, %v1310
        %v1312 = vpop.f32.mrb[0].mxu0
        %1313 = vmatprep.mubr.f32.mxu0 0.0
        %1314 = vmatmul.mubr.f32.gmra.mrb[0].mxu0 %v608
        %v1315 = vpop.f32.mrb[0].mxu0
        %v1316 = vadd.f32 %v1224, %v1315
        %v1317 = vpop.f32.mrb[0].mxu0
        %1318 = vmatprep.mubr.f32.mxu0 0.0
        %1319 = vmatmul.mubr.f32.gmra.mrb[0].mxu0 %v611
        %v1320 = vpop.f32.mrb[0].mxu0
        %v1321 = vadd.f32 %v1224, %v1320
        %v1322 = vpop.f32.mrb[0].mxu0
        %1323 = vmatprep.mubr.f32.mxu0 0.0
        %1324 = vmatmul.mubr.f32.gmra.mrb[0].mxu0 %v614
        %v1325 = vpop.f32.mrb[0].mxu0
        %v1326 = vadd.f32 %v1224, %v1325
        %v1327 = vpop.f32.mrb[0].mxu0
        %1328 = vmatprep.mubr.f32.mxu0 0.0
        %1329 = vmatmul.mubr.f32.gmra.mrb[0].mxu0 %v617
        %v1330 = vpop.f32.mrb[0].mxu0
        %v1331 = vadd.f32 %v1224, %v1330
        %v1332 = vpop.f32.mrb[0].mxu0
        %1333 = vmatprep.mubr.f32.mxu0 0.0
        %1334 = vmatmul.mubr.f32.gmra.mrb[0].mxu0 %v620
        %v1335 = vpop.f32.mrb[0].mxu0
        %v1336 = vadd.f32 %v1224, %v1335
        %v1337 = vpop.f32.mrb[0].mxu0
        %1338 = vmatprep.mubr.f32.mxu0 0.0
        %1339 = vmatmul.mubr.f32.gmra.mrb[0].mxu0 %v623
        %v1340 = vpop.f32.mrb[0].mxu0
        %v1341 = vadd.f32 %v1224, %v1340
        %v1342 = vpop.f32.mrb[0].mxu0
        %1343 = vmatprep.mubr.f32.mxu0 0.0
        %1344 = vmatmul.mubr.f32.gmra.mrb[0].mxu0 %v626
        %v1345 = vpop.f32.mrb[0].mxu0
        %v1346 = vadd.f32 %v1224, %v1345
        %v1347 = vpop.f32.mrb[0].mxu0
        %1348 = vdwg.mxu0
        %v1349 = vmax.f32 %v1296, 0.0
        %v1350 = vmax.f32 %v1301, 0.0
        %v1351 = vmax.f32 %v1306, 0.0
        %v1352 = vmax.f32 %v1311, 0.0
        %v1353 = vmax.f32 %v1316, 0.0
        %v1354 = vmax.f32 %v1321, 0.0
        %v1355 = vmax.f32 %v1326, 0.0
        %v1356 = vmax.f32 %v1331, 0.0
        %v1357 = vmax.f32 %v1336, 0.0
        %v1358 = vmax.f32 %v1341, 0.0
        %v1359 = vmax.f32 %v1346, 0.0
        %1360 = vst.msk [vmem:[%s405] sm:$0xff] %vm767, %v1349
        %1361 = vst.msk [vmem:[%s405 + $0x8] sm:$0xff] %vm767, %v1350
        %1362 = vst.msk [vmem:[%s405 + $0x10] sm:$0xff] %vm767, %v1351
        %1363 = vst.msk [vmem:[%s405 + $0x18] sm:$0xff] %vm767, %v1352
        %1364 = vst.msk [vmem:[%s405 + $0x20] sm:$0xff] %vm767, %v1353
        %1365 = vst.msk [vmem:[%s405 + $0x28] sm:$0xff] %vm767, %v1354
        %1366 = vst.msk [vmem:[%s405 + $0x30] sm:$0xff] %vm767, %v1355
        %1367 = vst.msk [vmem:[%s405 + $0x38] sm:$0xff] %vm767, %v1356
        %1368 = vst.msk [vmem:[%s405 + $0x40] sm:$0xff] %vm767, %v1357
        %1369 = vst.msk [vmem:[%s405 + $0x48] sm:$0xff] %vm767, %v1358
        %vm1370 = vcmask 254976
        %1371 = vst.msk [vmem:[%s405 + $0x50] sm:$0x3] %vm1370, %v1359
        %p1372 = scmp.lt.s32.totalorder %s23, 1
        %s1373 = scalar_select %p1372, %s23, 1
        %s1374 = smul.addr %s1373, 11
        %s1375 = smul.addr %s1374, 8
        %s1376 = scalar_lea.vmem %s8, %s1375
        // Predicated region
        $region77: #{classifier_forward.2} parent=51 // pred_check
          %p1377 = pneg %p219
        $region78: #{classifier_forward.2} parent=51 // pred_check_branch
          %1379 = sbr.rel (%p1377) target = $region80
        $region79: #{classifier_forward.2} parent=51 // pred_region
          _
        $region80: #{classifier_forward.2} parent=51 // pred_fallthru
          _
      $region52: #{classifier_forward.2} parent=5 // pred_fallthru
        _
      %p1380 = scmp.le.s32.totalorder 2, %s18
      // Predicated region
      $region81: #{classifier_forward.2} parent=5 // pred_check
        %p1381 = pneg %p1380
      $region82: #{classifier_forward.2} parent=5 // pred_check_branch
        %1383 = sbr.rel (%p1381) target = $region84
      $region83: #{classifier_forward.2} parent=5 // pred_region
        %s1384 = ssub.s32 %s18, 2
        // Predicated region
        $region85: #{classifier_forward.2} parent=83 // pred_check
          %p1385 = pneg %p225
        $region86: #{classifier_forward.2} parent=83 // pred_check_branch
          %1387 = sbr.rel (%p1385) target = $region88
        $region87: #{classifier_forward.2} parent=83 // pred_region
          %p1388 = scmp.lt.s32.totalorder %s24, 1
          %s1389 = scalar_select %p1388, %s24, 1
          %s1390 = smul.addr %s1389, 11
          %s1391 = smul.addr %s1390, 8
          %s1392 = scalar_lea.vmem %s8, %s1391
        $region88: #{classifier_forward.2} parent=83 // pred_fallthru
          _
      $region84: #{classifier_forward.2} parent=5 // pred_fallthru
        _
    $region6: #{classifier_forward.2} parent=1 // loop_footer
      %s22 = sadd.s32 1, %s18
    $region7: #{classifier_forward.2} parent=1 // loop_footer_branch
      %17 = sbr.rel target = $region3
    $region8: #{classifier_forward.2} parent=1 // loop_exit
      _
    %1393 = vsyncpa [#allocation3], 1
    %s1394 = scalar_lea.sflag [#allocation3], 1
    %1395 = vsyncpa %s1394, 1
    %1396 = vsyncpa [#allocation5], 1
    %1397 = vsyncpa [#allocation8], 1
    %1398 = vsyncpa [#allocation11], 1

// kernel: classifier_forward.3
$region0: #{classifier_forward.3}
  #allocation0 [shape = 'u32[]', space=smem, size = 0x4, offset = 0x4, fixed_abs, tag = 'smem constant byte address 0x4 - core index']
  #allocation1 [shape = 'u32[144,128]{1,0:T(1,128)}', space=vmem, size = 0x12000, scoped, tag = 'internal scratch']
  %s0 = inlined_call_operand.vmem [shape: f32[2,2624], index: 0, kind: input, shape index: {}]
  %s1 = inlined_call_operand.vmem [shape: f32[2624,64], index: 1, kind: input, shape index: {}]
  %s2 = inlined_call_operand.vmem [shape: f32[1,64], index: 2, kind: input, shape index: {}]
  %s3 = inlined_call_operand.vmem [shape: f32[64,3], index: 3, kind: input, shape index: {}]
  %s4 = inlined_call_operand.vmem [shape: f32[1,3], index: 4, kind: input, shape index: {}]
  %s5 = inlined_call_operand.hbm [shape: f32[2,3], index: 5, kind: output, shape index: {}]
  %s6 = sld [smem:[#allocation0]]
  $region30: #{classifier_forward.3} parent=0
    _
  %s8 = ssub.s32 1, %s6
  %s9 = scalar_select 0, %s8, %s6
  $region1: #{classifier_forward.3} parent=0
    #allocation2 [shape = 'u8[1024]{0}', space=vmem, size = 0x400, scoped, tag = 'output window, operand 0, single buffered']
    #allocation3 [shape = 's32[1]{0}', space=sflag, size = 0x4, scoped, tag = 'scoped memory for classifier_forward.3']
    %10 = vsyncpa [#allocation3], 0
    // Predicated region
    $region2: #{classifier_forward.3} parent=1 // pred_check
      _
    $region3: #{classifier_forward.3} parent=1 // pred_check_branch
      %12 = sbr.rel (0) target = $region5
    $region4: #{classifier_forward.3} parent=1 // pred_region
      _
    $region5: #{classifier_forward.3} parent=1 // pred_fallthru
      _
    // Predicated region
    $region6: #{classifier_forward.3} parent=1 // pred_check
      _
    $region7: #{classifier_forward.3} parent=1 // pred_check_branch
      %14 = sbr.rel (0) target = $region9
    $region8: #{classifier_forward.3} parent=1 // pred_region
      _
    $region9: #{classifier_forward.3} parent=1 // pred_fallthru
      _
    // Predicated region
    $region10: #{classifier_forward.3} parent=1 // pred_check
      _
    $region11: #{classifier_forward.3} parent=1 // pred_check_branch
      %16 = sbr.rel (0) target = $region13
    $region12: #{classifier_forward.3} parent=1 // pred_region
      _
    $region13: #{classifier_forward.3} parent=1 // pred_fallthru
      _
    // Predicated region
    $region14: #{classifier_forward.3} parent=1 // pred_check
      _
    $region15: #{classifier_forward.3} parent=1 // pred_check_branch
      %18 = sbr.rel (0) target = $region17
    $region16: #{classifier_forward.3} parent=1 // pred_region
      _
    $region17: #{classifier_forward.3} parent=1 // pred_fallthru
      _
    // Predicated region
    $region18: #{classifier_forward.3} parent=1 // pred_check
      _
    $region19: #{classifier_forward.3} parent=1 // pred_check_branch
      %20 = sbr.rel (0) target = $region21
    $region20: #{classifier_forward.3} parent=1 // pred_region
      _
    $region21: #{classifier_forward.3} parent=1 // pred_fallthru
      _
    %v21 = vld [vmem:[%s0] sm:$0xff]
    %v22 = vld [vmem:[%s0 + $0x8] sm:$0xff]
    %v23 = vld [vmem:[%s0 + $0x10] sm:$0xff]
    %v24 = vld [vmem:[%s0 + $0x18] sm:$0xff]
    %v25 = vld [vmem:[%s0 + $0x20] sm:$0xff]
    %v26 = vld [vmem:[%s0 + $0x28] sm:$0x3]
    %v27 = vld [vmem:[%s1] sm:$0xff]
    %v28 = vld [vmem:[%s1 + $0x8] sm:$0xff]
    %v29 = vld [vmem:[%s1 + $0x10] sm:$0xff]
    %v30 = vld [vmem:[%s1 + $0x18] sm:$0xff]
    %v31 = vld [vmem:[%s1 + $0x20] sm:$0xff]
    %v32 = vld [vmem:[%s1 + $0x28] sm:$0xff]
    %v33 = vld [vmem:[%s1 + $0x30] sm:$0xff]
    %v34 = vld [vmem:[%s1 + $0x38] sm:$0xff]
    %v35 = vld [vmem:[%s1 + $0x40] sm:$0xff]
    %v36 = vld [vmem:[%s1 + $0x48] sm:$0xff]
    %v37 = vld [vmem:[%s1 + $0x50] sm:$0xff]
    %v38 = vld [vmem:[%s1 + $0x58] sm:$0xff]
    %v39 = vld [vmem:[%s1 + $0x60] sm:$0xff]
    %v40 = vld [vmem:[%s1 + $0x68] sm:$0xff]
    %v41 = vld [vmem:[%s1 + $0x70] sm:$0xff]
    %v42 = vld [vmem:[%s1 + $0x78] sm:$0xff]
    %v43 = vld [vmem:[%s1 + $0x80] sm:$0xff]
    %v44 = vld [vmem:[%s1 + $0x88] sm:$0xff]
    %v45 = vld [vmem:[%s1 + $0x90] sm:$0xff]
    %v46 = vld [vmem:[%s1 + $0x98] sm:$0xff]
    %v47 = vld [vmem:[%s1 + $0xa0] sm:$0xff]
    %v48 = vld [vmem:[%s1 + $0xa8] sm:$0xff]
    %v49 = vld [vmem:[%s1 + $0xb0] sm:$0xff]
    %v50 = vld [vmem:[%s1 + $0xb8] sm:$0xff]
    %v51 = vld [vmem:[%s1 + $0xc0] sm:$0xff]
    %v52 = vld [vmem:[%s1 + $0xc8] sm:$0xff]
    %v53 = vld [vmem:[%s1 + $0xd0] sm:$0xff]
    %v54 = vld [vmem:[%s1 + $0xd8] sm:$0xff]
    %v55 = vld [vmem:[%s1 + $0xe0] sm:$0xff]
    %v56 = vld [vmem:[%s1 + $0xe8] sm:$0xff]
    %v57 = vld [vmem:[%s1 + $0xf0] sm:$0xff]
    %v58 = vld [vmem:[%s1 + $0xf8] sm:$0xff]
    %v59 = vld [vmem:[%s1 + $0x100] sm:$0xff]
    %v60 = vld [vmem:[%s1 + $0x108] sm:$0xff]
    %v61 = vld [vmem:[%s1 + $0x110] sm:$0xff]
    %v62 = vld [vmem:[%s1 + $0x118] sm:$0xff]
    %v63 = vld [vmem:[%s1 + $0x120] sm:$0xff]
    %v64 = vld [vmem:[%s1 + $0x128] sm:$0xff]
    %v65 = vld [vmem:[%s1 + $0x130] sm:$0xff]
    %v66 = vld [vmem:[%s1 + $0x138] sm:$0xff]
    %v67 = vld [vmem:[%s1 + $0x140] sm:$0xff]
    %v68 = vld [vmem:[%s1 + $0x148] sm:$0xff]
    %v69 = vld [vmem:[%s1 + $0x150] sm:$0xff]
    %v70 = vld [vmem:[%s1 + $0x158] sm:$0xff]
    %v71 = vld [vmem:[%s1 + $0x160] sm:$0xff]
    %v72 = vld [vmem:[%s1 + $0x168] sm:$0xff]
    %v73 = vld [vmem:[%s1 + $0x170] sm:$0xff]
    %v74 = vld [vmem:[%s1 + $0x178] sm:$0xff]
    %v75 = vld [vmem:[%s1 + $0x180] sm:$0xff]
    %v76 = vld [vmem:[%s1 + $0x188] sm:$0xff]
    %v77 = vld [vmem:[%s1 + $0x190] sm:$0xff]
    %v78 = vld [vmem:[%s1 + $0x198] sm:$0xff]
    %v79 = vld [vmem:[%s1 + $0x1a0] sm:$0xff]
    %v80 = vld [vmem:[%s1 + $0x1a8] sm:$0xff]
    %v81 = vld [vmem:[%s1 + $0x1b0] sm:$0xff]
    %v82 = vld [vmem:[%s1 + $0x1b8] sm:$0xff]
    %v83 = vld [vmem:[%s1 + $0x1c0] sm:$0xff]
    %v84 = vld [vmem:[%s1 + $0x1c8] sm:$0xff]
    %v85 = vld [vmem:[%s1 + $0x1d0] sm:$0xff]
    %v86 = vld [vmem:[%s1 + $0x1d8] sm:$0xff]
    %v87 = vld [vmem:[%s1 + $0x1e0] sm:$0xff]
    %v88 = vld [vmem:[%s1 + $0x1e8] sm:$0xff]
    %v89 = vld [vmem:[%s1 + $0x1f0] sm:$0xff]
    %v90 = vld [vmem:[%s1 + $0x1f8] sm:$0xff]
    %v91 = vld [vmem:[%s1 + $0x200] sm:$0xff]
    %v92 = vld [vmem:[%s1 + $0x208] sm:$0xff]
    %v93 = vld [vmem:[%s1 + $0x210] sm:$0xff]
    %v94 = vld [vmem:[%s1 + $0x218] sm:$0xff]
    %v95 = vld [vmem:[%s1 + $0x220] sm:$0xff]
    %v96 = vld [vmem:[%s1 + $0x228] sm:$0xff]
    %v97 = vld [vmem:[%s1 + $0x230] sm:$0xff]
    %v98 = vld [vmem:[%s1 + $0x238] sm:$0xff]
    %v99 = vld [vmem:[%s1 + $0x240] sm:$0xff]
    %v100 = vld [vmem:[%s1 + $0x248] sm:$0xff]
    %v101 = vld [vmem:[%s1 + $0x250] sm:$0xff]
    %v102 = vld [vmem:[%s1 + $0x258] sm:$0xff]
    %v103 = vld [vmem:[%s1 + $0x260] sm:$0xff]
    %v104 = vld [vmem:[%s1 + $0x268] sm:$0xff]
    %v105 = vld [vmem:[%s1 + $0x270] sm:$0xff]
    %v106 = vld [vmem:[%s1 + $0x278] sm:$0xff]
    %v107 = vld [vmem:[%s1 + $0x280] sm:$0xff]
    %v108 = vld [vmem:[%s1 + $0x288] sm:$0xff]
    %v109 = vld [vmem:[%s1 + $0x290] sm:$0xff]
    %v110 = vld [vmem:[%s1 + $0x298] sm:$0xff]
    %v111 = vld [vmem:[%s1 + $0x2a0] sm:$0xff]
    %v112 = vld [vmem:[%s1 + $0x2a8] sm:$0xff]
    %v113 = vld [vmem:[%s1 + $0x2b0] sm:$0xff]
    %v114 = vld [vmem:[%s1 + $0x2b8] sm:$0xff]
    %v115 = vld [vmem:[%s1 + $0x2c0] sm:$0xff]
    %v116 = vld [vmem:[%s1 + $0x2c8] sm:$0xff]
    %v117 = vld [vmem:[%s1 + $0x2d0] sm:$0xff]
    %v118 = vld [vmem:[%s1 + $0x2d8] sm:$0xff]
    %v119 = vld [vmem:[%s1 + $0x2e0] sm:$0xff]
    %v120 = vld [vmem:[%s1 + $0x2e8] sm:$0xff]
    %v121 = vld [vmem:[%s1 + $0x2f0] sm:$0xff]
    %v122 = vld [vmem:[%s1 + $0x2f8] sm:$0xff]
    %v123 = vld [vmem:[%s1 + $0x300] sm:$0xff]
    %v124 = vld [vmem:[%s1 + $0x308] sm:$0xff]
    %v125 = vld [vmem:[%s1 + $0x310] sm:$0xff]
    %v126 = vld [vmem:[%s1 + $0x318] sm:$0xff]
    %v127 = vld [vmem:[%s1 + $0x320] sm:$0xff]
    %v128 = vld [vmem:[%s1 + $0x328] sm:$0xff]
    %v129 = vld [vmem:[%s1 + $0x330] sm:$0xff]
    %v130 = vld [vmem:[%s1 + $0x338] sm:$0xff]
    %v131 = vld [vmem:[%s1 + $0x340] sm:$0xff]
    %v132 = vld [vmem:[%s1 + $0x348] sm:$0xff]
    %v133 = vld [vmem:[%s1 + $0x350] sm:$0xff]
    %v134 = vld [vmem:[%s1 + $0x358] sm:$0xff]
    %v135 = vld [vmem:[%s1 + $0x360] sm:$0xff]
    %v136 = vld [vmem:[%s1 + $0x368] sm:$0xff]
    %v137 = vld [vmem:[%s1 + $0x370] sm:$0xff]
    %v138 = vld [vmem:[%s1 + $0x378] sm:$0xff]
    %v139 = vld [vmem:[%s1 + $0x380] sm:$0xff]
    %v140 = vld [vmem:[%s1 + $0x388] sm:$0xff]
    %v141 = vld [vmem:[%s1 + $0x390] sm:$0xff]
    %v142 = vld [vmem:[%s1 + $0x398] sm:$0xff]
    %v143 = vld [vmem:[%s1 + $0x3a0] sm:$0xff]
    %v144 = vld [vmem:[%s1 + $0x3a8] sm:$0xff]
    %v145 = vld [vmem:[%s1 + $0x3b0] sm:$0xff]
    %v146 = vld [vmem:[%s1 + $0x3b8] sm:$0xff]
    %v147 = vld [vmem:[%s1 + $0x3c0] sm:$0xff]
    %v148 = vld [vmem:[%s1 + $0x3c8] sm:$0xff]
    %v149 = vld [vmem:[%s1 + $0x3d0] sm:$0xff]
    %v150 = vld [vmem:[%s1 + $0x3d8] sm:$0xff]
    %v151 = vld [vmem:[%s1 + $0x3e0] sm:$0xff]
    %v152 = vld [vmem:[%s1 + $0x3e8] sm:$0xff]
    %v153 = vld [vmem:[%s1 + $0x3f0] sm:$0xff]
    %v154 = vld [vmem:[%s1 + $0x3f8] sm:$0xff]
    %v155 = vld [vmem:[%s1 + $0x400] sm:$0xff]
    %v156 = vld [vmem:[%s1 + $0x408] sm:$0xff]
    %v157 = vld [vmem:[%s1 + $0x410] sm:$0xff]
    %v158 = vld [vmem:[%s1 + $0x418] sm:$0xff]
    %v159 = vld [vmem:[%s1 + $0x420] sm:$0xff]
    %v160 = vld [vmem:[%s1 + $0x428] sm:$0xff]
    %v161 = vld [vmem:[%s1 + $0x430] sm:$0xff]
    %v162 = vld [vmem:[%s1 + $0x438] sm:$0xff]
    %v163 = vld [vmem:[%s1 + $0x440] sm:$0xff]
    %v164 = vld [vmem:[%s1 + $0x448] sm:$0xff]
    %v165 = vld [vmem:[%s1 + $0x450] sm:$0xff]
    %v166 = vld [vmem:[%s1 + $0x458] sm:$0xff]
    %v167 = vld [vmem:[%s1 + $0x460] sm:$0xff]
    %v168 = vld [vmem:[%s1 + $0x468] sm:$0xff]
    %v169 = vld [vmem:[%s1 + $0x470] sm:$0xff]
    %v170 = vld [vmem:[%s1 + $0x478] sm:$0xff]
    %v171 = vld [vmem:[%s1 + $0x480] sm:$0xff]
    %v172 = vld [vmem:[%s1 + $0x488] sm:$0xff]
    %v173 = vld [vmem:[%s1 + $0x490] sm:$0xff]
    %v174 = vld [vmem:[%s1 + $0x498] sm:$0xff]
    %v175 = vld [vmem:[%s1 + $0x4a0] sm:$0xff]
    %v176 = vld [vmem:[%s1 + $0x4a8] sm:$0xff]
    %v177 = vld [vmem:[%s1 + $0x4b0] sm:$0xff]
    %v178 = vld [vmem:[%s1 + $0x4b8] sm:$0xff]
    %v179 = vld [vmem:[%s1 + $0x4c0] sm:$0xff]
    %v180 = vld [vmem:[%s1 + $0x4c8] sm:$0xff]
    %v181 = vld [vmem:[%s1 + $0x4d0] sm:$0xff]
    %v182 = vld [vmem:[%s1 + $0x4d8] sm:$0xff]
    %v183 = vld [vmem:[%s1 + $0x4e0] sm:$0xff]
    %v184 = vld [vmem:[%s1 + $0x4e8] sm:$0xff]
    %v185 = vld [vmem:[%s1 + $0x4f0] sm:$0xff]
    %v186 = vld [vmem:[%s1 + $0x4f8] sm:$0xff]
    %v187 = vld [vmem:[%s1 + $0x500] sm:$0xff]
    %v188 = vld [vmem:[%s1 + $0x508] sm:$0xff]
    %v189 = vld [vmem:[%s1 + $0x510] sm:$0xff]
    %v190 = vld [vmem:[%s1 + $0x518] sm:$0xff]
    %v191 = vld [vmem:[%s1 + $0x520] sm:$0xff]
    %v192 = vld [vmem:[%s1 + $0x528] sm:$0xff]
    %v193 = vld [vmem:[%s1 + $0x530] sm:$0xff]
    %v194 = vld [vmem:[%s1 + $0x538] sm:$0xff]
    %v195 = vld [vmem:[%s1 + $0x540] sm:$0xff]
    %v196 = vld [vmem:[%s1 + $0x548] sm:$0xff]
    %v197 = vld [vmem:[%s1 + $0x550] sm:$0xff]
    %v198 = vld [vmem:[%s1 + $0x558] sm:$0xff]
    %v199 = vld [vmem:[%s1 + $0x560] sm:$0xff]
    %v200 = vld [vmem:[%s1 + $0x568] sm:$0xff]
    %v201 = vld [vmem:[%s1 + $0x570] sm:$0xff]
    %v202 = vld [vmem:[%s1 + $0x578] sm:$0xff]
    %v203 = vld [vmem:[%s1 + $0x580] sm:$0xff]
    %v204 = vld [vmem:[%s1 + $0x588] sm:$0xff]
    %v205 = vld [vmem:[%s1 + $0x590] sm:$0xff]
    %v206 = vld [vmem:[%s1 + $0x598] sm:$0xff]
    %v207 = vld [vmem:[%s1 + $0x5a0] sm:$0xff]
    %v208 = vld [vmem:[%s1 + $0x5a8] sm:$0xff]
    %v209 = vld [vmem:[%s1 + $0x5b0] sm:$0xff]
    %v210 = vld [vmem:[%s1 + $0x5b8] sm:$0xff]
    %v211 = vld [vmem:[%s1 + $0x5c0] sm:$0xff]
    %v212 = vld [vmem:[%s1 + $0x5c8] sm:$0xff]
    %v213 = vld [vmem:[%s1 + $0x5d0] sm:$0xff]
    %v214 = vld [vmem:[%s1 + $0x5d8] sm:$0xff]
    %v215 = vld [vmem:[%s1 + $0x5e0] sm:$0xff]
    %v216 = vld [vmem:[%s1 + $0x5e8] sm:$0xff]
    %v217 = vld [vmem:[%s1 + $0x5f0] sm:$0xff]
    %v218 = vld [vmem:[%s1 + $0x5f8] sm:$0xff]
    %v219 = vld [vmem:[%s1 + $0x600] sm:$0xff]
    %v220 = vld [vmem:[%s1 + $0x608] sm:$0xff]
    %v221 = vld [vmem:[%s1 + $0x610] sm:$0xff]
    %v222 = vld [vmem:[%s1 + $0x618] sm:$0xff]
    %v223 = vld [vmem:[%s1 + $0x620] sm:$0xff]
    %v224 = vld [vmem:[%s1 + $0x628] sm:$0xff]
    %v225 = vld [vmem:[%s1 + $0x630] sm:$0xff]
    %v226 = vld [vmem:[%s1 + $0x638] sm:$0xff]
    %v227 = vld [vmem:[%s1 + $0x640] sm:$0xff]
    %v228 = vld [vmem:[%s1 + $0x648] sm:$0xff]
    %v229 = vld [vmem:[%s1 + $0x650] sm:$0xff]
    %v230 = vld [vmem:[%s1 + $0x658] sm:$0xff]
    %v231 = vld [vmem:[%s1 + $0x660] sm:$0xff]
    %v232 = vld [vmem:[%s1 + $0x668] sm:$0xff]
    %v233 = vld [vmem:[%s1 + $0x670] sm:$0xff]
    %v234 = vld [vmem:[%s1 + $0x678] sm:$0xff]
    %v235 = vld [vmem:[%s1 + $0x680] sm:$0xff]
    %v236 = vld [vmem:[%s1 + $0x688] sm:$0xff]
    %v237 = vld [vmem:[%s1 + $0x690] sm:$0xff]
    %v238 = vld [vmem:[%s1 + $0x698] sm:$0xff]
    %v239 = vld [vmem:[%s1 + $0x6a0] sm:$0xff]
    %v240 = vld [vmem:[%s1 + $0x6a8] sm:$0xff]
    %v241 = vld [vmem:[%s1 + $0x6b0] sm:$0xff]
    %v242 = vld [vmem:[%s1 + $0x6b8] sm:$0xff]
    %v243 = vld [vmem:[%s1 + $0x6c0] sm:$0xff]
    %v244 = vld [vmem:[%s1 + $0x6c8] sm:$0xff]
    %v245 = vld [vmem:[%s1 + $0x6d0] sm:$0xff]
    %v246 = vld [vmem:[%s1 + $0x6d8] sm:$0xff]
    %v247 = vld [vmem:[%s1 + $0x6e0] sm:$0xff]
    %v248 = vld [vmem:[%s1 + $0x6e8] sm:$0xff]
    %v249 = vld [vmem:[%s1 + $0x6f0] sm:$0xff]
    %v250 = vld [vmem:[%s1 + $0x6f8] sm:$0xff]
    %v251 = vld [vmem:[%s1 + $0x700] sm:$0xff]
    %v252 = vld [vmem:[%s1 + $0x708] sm:$0xff]
    %v253 = vld [vmem:[%s1 + $0x710] sm:$0xff]
    %v254 = vld [vmem:[%s1 + $0x718] sm:$0xff]
    %v255 = vld [vmem:[%s1 + $0x720] sm:$0xff]
    %v256 = vld [vmem:[%s1 + $0x728] sm:$0xff]
    %v257 = vld [vmem:[%s1 + $0x730] sm:$0xff]
    %v258 = vld [vmem:[%s1 + $0x738] sm:$0xff]
    %v259 = vld [vmem:[%s1 + $0x740] sm:$0xff]
    %v260 = vld [vmem:[%s1 + $0x748] sm:$0xff]
    %v261 = vld [vmem:[%s1 + $0x750] sm:$0xff]
    %v262 = vld [vmem:[%s1 + $0x758] sm:$0xff]
    %v263 = vld [vmem:[%s1 + $0x760] sm:$0xff]
    %v264 = vld [vmem:[%s1 + $0x768] sm:$0xff]
    %v265 = vld [vmem:[%s1 + $0x770] sm:$0xff]
    %v266 = vld [vmem:[%s1 + $0x778] sm:$0xff]
    %v267 = vld [vmem:[%s1 + $0x780] sm:$0xff]
    %v268 = vld [vmem:[%s1 + $0x788] sm:$0xff]
    %v269 = vld [vmem:[%s1 + $0x790] sm:$0xff]
    %v270 = vld [vmem:[%s1 + $0x798] sm:$0xff]
    %v271 = vld [vmem:[%s1 + $0x7a0] sm:$0xff]
    %v272 = vld [vmem:[%s1 + $0x7a8] sm:$0xff]
    %v273 = vld [vmem:[%s1 + $0x7b0] sm:$0xff]
    %v274 = vld [vmem:[%s1 + $0x7b8] sm:$0xff]
    %v275 = vld [vmem:[%s1 + $0x7c0] sm:$0xff]
    %v276 = vld [vmem:[%s1 + $0x7c8] sm:$0xff]
    %v277 = vld [vmem:[%s1 + $0x7d0] sm:$0xff]
    %v278 = vld [vmem:[%s1 + $0x7d8] sm:$0xff]
    %v279 = vld [vmem:[%s1 + $0x7e0] sm:$0xff]
    %v280 = vld [vmem:[%s1 + $0x7e8] sm:$0xff]
    %v281 = vld [vmem:[%s1 + $0x7f0] sm:$0xff]
    %v282 = vld [vmem:[%s1 + $0x7f8] sm:$0xff]
    %v283 = vld [vmem:[%s1 + $0x800] sm:$0xff]
    %v284 = vld [vmem:[%s1 + $0x808] sm:$0xff]
    %v285 = vld [vmem:[%s1 + $0x810] sm:$0xff]
    %v286 = vld [vmem:[%s1 + $0x818] sm:$0xff]
    %v287 = vld [vmem:[%s1 + $0x820] sm:$0xff]
    %v288 = vld [vmem:[%s1 + $0x828] sm:$0xff]
    %v289 = vld [vmem:[%s1 + $0x830] sm:$0xff]
    %v290 = vld [vmem:[%s1 + $0x838] sm:$0xff]
    %v291 = vld [vmem:[%s1 + $0x840] sm:$0xff]
    %v292 = vld [vmem:[%s1 + $0x848] sm:$0xff]
    %v293 = vld [vmem:[%s1 + $0x850] sm:$0xff]
    %v294 = vld [vmem:[%s1 + $0x858] sm:$0xff]
    %v295 = vld [vmem:[%s1 + $0x860] sm:$0xff]
    %v296 = vld [vmem:[%s1 + $0x868] sm:$0xff]
    %v297 = vld [vmem:[%s1 + $0x870] sm:$0xff]
    %v298 = vld [vmem:[%s1 + $0x878] sm:$0xff]
    %v299 = vld [vmem:[%s1 + $0x880] sm:$0xff]
    %v300 = vld [vmem:[%s1 + $0x888] sm:$0xff]
    %v301 = vld [vmem:[%s1 + $0x890] sm:$0xff]
    %v302 = vld [vmem:[%s1 + $0x898] sm:$0xff]
    %v303 = vld [vmem:[%s1 + $0x8a0] sm:$0xff]
    %v304 = vld [vmem:[%s1 + $0x8a8] sm:$0xff]
    %v305 = vld [vmem:[%s1 + $0x8b0] sm:$0xff]
    %v306 = vld [vmem:[%s1 + $0x8b8] sm:$0xff]
    %v307 = vld [vmem:[%s1 + $0x8c0] sm:$0xff]
    %v308 = vld [vmem:[%s1 + $0x8c8] sm:$0xff]
    %v309 = vld [vmem:[%s1 + $0x8d0] sm:$0xff]
    %v310 = vld [vmem:[%s1 + $0x8d8] sm:$0xff]
    %v311 = vld [vmem:[%s1 + $0x8e0] sm:$0xff]
    %v312 = vld [vmem:[%s1 + $0x8e8] sm:$0xff]
    %v313 = vld [vmem:[%s1 + $0x8f0] sm:$0xff]
    %v314 = vld [vmem:[%s1 + $0x8f8] sm:$0xff]
    %v315 = vld [vmem:[%s1 + $0x900] sm:$0xff]
    %v316 = vld [vmem:[%s1 + $0x908] sm:$0xff]
    %v317 = vld [vmem:[%s1 + $0x910] sm:$0xff]
    %v318 = vld [vmem:[%s1 + $0x918] sm:$0xff]
    %v319 = vld [vmem:[%s1 + $0x920] sm:$0xff]
    %v320 = vld [vmem:[%s1 + $0x928] sm:$0xff]
    %v321 = vld [vmem:[%s1 + $0x930] sm:$0xff]
    %v322 = vld [vmem:[%s1 + $0x938] sm:$0xff]
    %v323 = vld [vmem:[%s1 + $0x940] sm:$0xff]
    %v324 = vld [vmem:[%s1 + $0x948] sm:$0xff]
    %v325 = vld [vmem:[%s1 + $0x950] sm:$0xff]
    %v326 = vld [vmem:[%s1 + $0x958] sm:$0xff]
    %v327 = vld [vmem:[%s1 + $0x960] sm:$0xff]
    %v328 = vld [vmem:[%s1 + $0x968] sm:$0xff]
    %v329 = vld [vmem:[%s1 + $0x970] sm:$0xff]
    %v330 = vld [vmem:[%s1 + $0x978] sm:$0xff]
    %v331 = vld [vmem:[%s1 + $0x980] sm:$0xff]
    %v332 = vld [vmem:[%s1 + $0x988] sm:$0xff]
    %v333 = vld [vmem:[%s1 + $0x990] sm:$0xff]
    %v334 = vld [vmem:[%s1 + $0x998] sm:$0xff]
    %v335 = vld [vmem:[%s1 + $0x9a0] sm:$0xff]
    %v336 = vld [vmem:[%s1 + $0x9a8] sm:$0xff]
    %v337 = vld [vmem:[%s1 + $0x9b0] sm:$0xff]
    %v338 = vld [vmem:[%s1 + $0x9b8] sm:$0xff]
    %v339 = vld [vmem:[%s1 + $0x9c0] sm:$0xff]
    %v340 = vld [vmem:[%s1 + $0x9c8] sm:$0xff]
    %v341 = vld [vmem:[%s1 + $0x9d0] sm:$0xff]
    %v342 = vld [vmem:[%s1 + $0x9d8] sm:$0xff]
    %v343 = vld [vmem:[%s1 + $0x9e0] sm:$0xff]
    %v344 = vld [vmem:[%s1 + $0x9e8] sm:$0xff]
    %v345 = vld [vmem:[%s1 + $0x9f0] sm:$0xff]
    %v346 = vld [vmem:[%s1 + $0x9f8] sm:$0xff]
    %v347 = vld [vmem:[%s1 + $0xa00] sm:$0xff]
    %v348 = vld [vmem:[%s1 + $0xa08] sm:$0xff]
    %v349 = vld [vmem:[%s1 + $0xa10] sm:$0xff]
    %v350 = vld [vmem:[%s1 + $0xa18] sm:$0xff]
    %v351 = vld [vmem:[%s1 + $0xa20] sm:$0xff]
    %v352 = vld [vmem:[%s1 + $0xa28] sm:$0xff]
    %v353 = vld [vmem:[%s1 + $0xa30] sm:$0xff]
    %v354 = vld [vmem:[%s1 + $0xa38] sm:$0xff]
    %v355 = vld [vmem:[%s2] sm:$0x1]
    %v357 = vlaneseq
    %v358 = vshrl.u32 %v357, 7
    %v359 = vsub.s32 0, %v358
    %v360 = vrot.slane %v355, %v359
    %v368 = vcombine.high %v21, %v21
    %v370 = vunpack.c.l.s4 1983009808
    %v371 = vunpack.c.0.s8 %v370
    %v372 = vlaneseq
    %v373 = vshrl.u32 %v372, 7
    %v374 = vsub.s32 %v371, %v373
    %v375 = vrot.slane %v21, %v374
    %v377 = vunpack.c.l.s4 1983009808
    %v378 = vunpack.c.0.s8 %v377
    %v379 = vlaneseq
    %v380 = vshrl.u32 %v379, 7
    %v381 = vsub.s32 %v378, %v380
    %v382 = vrot.slane %v368, %v381
    %v383 = vcombine.high %v375, %v375
    %v384 = vcombine.high %v382, %v382
    %v385 = vcombine.high %v22, %v22
    %v387 = vunpack.c.l.s4 1983009808
    %v388 = vunpack.c.0.s8 %v387
    %v389 = vlaneseq
    %v390 = vshrl.u32 %v389, 7
    %v391 = vsub.s32 %v388, %v390
    %v392 = vrot.slane %v22, %v391
    %v394 = vunpack.c.l.s4 1983009808
    %v395 = vunpack.c.0.s8 %v394
    %v396 = vlaneseq
    %v397 = vshrl.u32 %v396, 7
    %v398 = vsub.s32 %v395, %v397
    %v399 = vrot.slane %v385, %v398
    %v400 = vcombine.high %v392, %v392
    %v401 = vcombine.high %v399, %v399
    %v402 = vcombine.high %v23, %v23
    %v404 = vunpack.c.l.s4 1983009808
    %v405 = vunpack.c.0.s8 %v404
    %v406 = vlaneseq
    %v407 = vshrl.u32 %v406, 7
    %v408 = vsub.s32 %v405, %v407
    %v409 = vrot.slane %v23, %v408
    %v411 = vunpack.c.l.s4 1983009808
    %v412 = vunpack.c.0.s8 %v411
    %v413 = vlaneseq
    %v414 = vshrl.u32 %v413, 7
    %v415 = vsub.s32 %v412, %v414
    %v416 = vrot.slane %v402, %v415
    %v417 = vcombine.high %v409, %v409
    %v418 = vcombine.high %v416, %v416
    %v419 = vcombine.high %v24, %v24
    %v421 = vunpack.c.l.s4 1983009808
    %v422 = vunpack.c.0.s8 %v421
    %v423 = vlaneseq
    %v424 = vshrl.u32 %v423, 7
    %v425 = vsub.s32 %v422, %v424
    %v426 = vrot.slane %v24, %v425
    %v428 = vunpack.c.l.s4 1983009808
    %v429 = vunpack.c.0.s8 %v428
    %v430 = vlaneseq
    %v431 = vshrl.u32 %v430, 7
    %v432 = vsub.s32 %v429, %v431
    %v433 = vrot.slane %v419, %v432
    %v434 = vcombine.high %v426, %v426
    %v435 = vcombine.high %v433, %v433
    %v436 = vcombine.high %v25, %v25
    %v438 = vunpack.c.l.s4 1983009808
    %v439 = vunpack.c.0.s8 %v438
    %v440 = vlaneseq
    %v441 = vshrl.u32 %v440, 7
    %v442 = vsub.s32 %v439, %v441
    %v443 = vrot.slane %v25, %v442
    %v445 = vunpack.c.l.s4 1983009808
    %v446 = vunpack.c.0.s8 %v445
    %v447 = vlaneseq
    %v448 = vshrl.u32 %v447, 7
    %v449 = vsub.s32 %v446, %v448
    %v450 = vrot.slane %v436, %v449
    %v451 = vcombine.high %v443, %v443
    %v452 = vcombine.high %v450, %v450
    %v454 = vunpack.c.l.s4 1983009808
    %v455 = vunpack.c.0.s8 %v454
    %v456 = vlaneseq
    %v457 = vshrl.u32 %v456, 7
    %v458 = vsub.s32 %v455, %v457
    %v459 = vrot.slane %v26, %v458
    %vm480 = vcmask 523264
    %v481 = vsel %vm480, %v459, 0
    %483 = vmatprep.subr.mxu0 0.0
    %484 = vmatpush1.msra.mxu0 %v27
    %485 = vmatprep.subr.mxu0 0.0
    %486 = vmatpush1.msra.mxu0 %v28
    %487 = vmatprep.subr.mxu0 0.0
    %488 = vmatpush1.msra.mxu0 %v29
    %489 = vmatprep.subr.mxu0 0.0
    %490 = vmatpush1.msra.mxu0 %v30
    %491 = vmatprep.subr.mxu0 0.0
    %492 = vmatpush1.msra.mxu0 %v31
    %493 = vmatprep.subr.mxu0 0.0
    %494 = vmatpush1.msra.mxu0 %v32
    %495 = vmatprep.subr.mxu0 0.0
    %496 = vmatpush1.msra.mxu0 %v33
    %497 = vmatprep.subr.mxu0 0.0
    %498 = vmatpush1.msra.mxu0 %v34
    %499 = vmatprep.subr.mxu0 0.0
    %500 = vmatpush1.msra.mxu0 %v35
    %501 = vmatprep.subr.mxu0 0.0
    %502 = vmatpush1.msra.mxu0 %v36
    %503 = vmatprep.subr.mxu0 0.0
    %504 = vmatpush1.msra.mxu0 %v37
    %505 = vmatprep.subr.mxu0 0.0
    %506 = vmatpush1.msra.mxu0 %v38
    %507 = vmatprep.subr.mxu0 0.0
    %508 = vmatpush1.msra.mxu0 %v39
    %509 = vmatprep.subr.mxu0 0.0
    %510 = vmatpush1.msra.mxu0 %v40
    %511 = vmatprep.subr.mxu0 0.0
    %512 = vmatpush1.msra.mxu0 %v41
    %513 = vmatprep.subr.mxu0 0.0
    %514 = vmatpush1.msra.mxu0 %v42
    %515 = vmatprep.subr.mxu0 0.0
    %516 = vmatpush1.msra.mxu0 %v43
    %517 = vmatprep.subr.mxu0 0.0
    %518 = vmatpush1.msra.mxu0 %v44
    %519 = vmatprep.subr.mxu0 0.0
    %520 = vmatpush1.msra.mxu0 %v45
    %521 = vmatprep.subr.mxu0 0.0
    %522 = vmatpush1.msra.mxu0 %v46
    %523 = vmatprep.subr.mxu0 0.0
    %524 = vmatpush1.msra.mxu0 %v47
    %525 = vmatprep.subr.mxu0 0.0
    %526 = vmatpush1.msra.mxu0 %v48
    %527 = vmatprep.subr.mxu0 0.0
    %528 = vmatpush1.msra.mxu0 %v49
    %529 = vmatprep.subr.mxu0 0.0
    %530 = vmatpush1.msra.mxu0 %v50
    %531 = vmatprep.subr.mxu0 0.0
    %532 = vmatpush1.msra.mxu0 %v51
    %533 = vmatprep.subr.mxu0 0.0
    %534 = vmatpush1.msra.mxu0 %v52
    %535 = vmatprep.subr.mxu0 0.0
    %536 = vmatpush1.msra.mxu0 %v53
    %537 = vmatprep.subr.mxu0 0.0
    %538 = vmatpush1.msra.mxu0 %v54
    %539 = vmatprep.subr.mxu0 0.0
    %540 = vmatpush1.msra.mxu0 %v55
    %541 = vmatprep.subr.mxu0 0.0
    %542 = vmatpush1.msra.mxu0 %v56
    %543 = vmatprep.subr.mxu0 0.0
    %544 = vmatpush1.msra.mxu0 %v57
    %545 = vmatprep.subr.mxu0 0.0
    %546 = vmatpush1.msra.mxu0 %v58
    %547 = vmatprep.mubr.f32.mxu0 %v383
    %548 = vmatmul.mubr.f32.gmra.mrb[0].mxu0 %v375
    %v549 = vpop.f32.mrb[0].mxu0
    %v550 = vadd.f32 %v360, %v549
    %v551 = vpop.f32.mrb[0].mxu0
    %552 = vdwg.mxu0
    %553 = vmatprep.subr.mxu0 0.0
    %554 = vmatpush1.msra.mxu0 %v59
    %555 = vmatprep.subr.mxu0 0.0
    %556 = vmatpush1.msra.mxu0 %v60
    %557 = vmatprep.subr.mxu0 0.0
    %558 = vmatpush1.msra.mxu0 %v61
    %559 = vmatprep.subr.mxu0 0.0
    %560 = vmatpush1.msra.mxu0 %v62
    %561 = vmatprep.subr.mxu0 0.0
    %562 = vmatpush1.msra.mxu0 %v63
    %563 = vmatprep.subr.mxu0 0.0
    %564 = vmatpush1.msra.mxu0 %v64
    %565 = vmatprep.subr.mxu0 0.0
    %566 = vmatpush1.msra.mxu0 %v65
    %567 = vmatprep.subr.mxu0 0.0
    %568 = vmatpush1.msra.mxu0 %v66
    %569 = vmatprep.subr.mxu0 0.0
    %570 = vmatpush1.msra.mxu0 %v67
    %571 = vmatprep.subr.mxu0 0.0
    %572 = vmatpush1.msra.mxu0 %v68
    %573 = vmatprep.subr.mxu0 0.0
    %574 = vmatpush1.msra.mxu0 %v69
    %575 = vmatprep.subr.mxu0 0.0
    %576 = vmatpush1.msra.mxu0 %v70
    %577 = vmatprep.subr.mxu0 0.0
    %578 = vmatpush1.msra.mxu0 %v71
    %579 = vmatprep.subr.mxu0 0.0
    %580 = vmatpush1.msra.mxu0 %v72
    %581 = vmatprep.subr.mxu0 0.0
    %582 = vmatpush1.msra.mxu0 %v73
    %583 = vmatprep.subr.mxu0 0.0
    %584 = vmatpush1.msra.mxu0 %v74
    %585 = vmatprep.subr.mxu0 0.0
    %586 = vmatpush1.msra.mxu0 %v75
    %587 = vmatprep.subr.mxu0 0.0
    %588 = vmatpush1.msra.mxu0 %v76
    %589 = vmatprep.subr.mxu0 0.0
    %590 = vmatpush1.msra.mxu0 %v77
    %591 = vmatprep.subr.mxu0 0.0
    %592 = vmatpush1.msra.mxu0 %v78
    %593 = vmatprep.subr.mxu0 0.0
    %594 = vmatpush1.msra.mxu0 %v79
    %595 = vmatprep.subr.mxu0 0.0
    %596 = vmatpush1.msra.mxu0 %v80
    %597 = vmatprep.subr.mxu0 0.0
    %598 = vmatpush1.msra.mxu0 %v81
    %599 = vmatprep.subr.mxu0 0.0
    %600 = vmatpush1.msra.mxu0 %v82
    %601 = vmatprep.subr.mxu0 0.0
    %602 = vmatpush1.msra.mxu0 %v83
    %603 = vmatprep.subr.mxu0 0.0
    %604 = vmatpush1.msra.mxu0 %v84
    %605 = vmatprep.subr.mxu0 0.0
    %606 = vmatpush1.msra.mxu0 %v85
    %607 = vmatprep.subr.mxu0 0.0
    %608 = vmatpush1.msra.mxu0 %v86
    %609 = vmatprep.subr.mxu0 0.0
    %610 = vmatpush1.msra.mxu0 %v87
    %611 = vmatprep.subr.mxu0 0.0
    %612 = vmatpush1.msra.mxu0 %v88
    %613 = vmatprep.subr.mxu0 0.0
    %614 = vmatpush1.msra.mxu0 %v89
    %615 = vmatprep.subr.mxu0 0.0
    %616 = vmatpush1.msra.mxu0 %v90
    %617 = vmatprep.mubr.f32.mxu0 %v384
    %618 = vmatmul.mubr.f32.gmra.mrb[0].mxu0 %v382
    %v619 = vpop.f32.mrb[0].mxu0
    %v620 = vadd.f32 %v550, %v619
    %v621 = vpop.f32.mrb[0].mxu0
    %622 = vdwg.mxu0
    %623 = vmatprep.subr.mxu0 0.0
    %624 = vmatpush1.msra.mxu0 %v91
    %625 = vmatprep.subr.mxu0 0.0
    %626 = vmatpush1.msra.mxu0 %v92
    %627 = vmatprep.subr.mxu0 0.0
    %628 = vmatpush1.msra.mxu0 %v93
    %629 = vmatprep.subr.mxu0 0.0
    %630 = vmatpush1.msra.mxu0 %v94
    %631 = vmatprep.subr.mxu0 0.0
    %632 = vmatpush1.msra.mxu0 %v95
    %633 = vmatprep.subr.mxu0 0.0
    %634 = vmatpush1.msra.mxu0 %v96
    %635 = vmatprep.subr.mxu0 0.0
    %636 = vmatpush1.msra.mxu0 %v97
    %637 = vmatprep.subr.mxu0 0.0
    %638 = vmatpush1.msra.mxu0 %v98
    %639 = vmatprep.subr.mxu0 0.0
    %640 = vmatpush1.msra.mxu0 %v99
    %641 = vmatprep.subr.mxu0 0.0
    %642 = vmatpush1.msra.mxu0 %v100
    %643 = vmatprep.subr.mxu0 0.0
    %644 = vmatpush1.msra.mxu0 %v101
    %645 = vmatprep.subr.mxu0 0.0
    %646 = vmatpush1.msra.mxu0 %v102
    %647 = vmatprep.subr.mxu0 0.0
    %648 = vmatpush1.msra.mxu0 %v103
    %649 = vmatprep.subr.mxu0 0.0
    %650 = vmatpush1.msra.mxu0 %v104
    %651 = vmatprep.subr.mxu0 0.0
    %652 = vmatpush1.msra.mxu0 %v105
    %653 = vmatprep.subr.mxu0 0.0
    %654 = vmatpush1.msra.mxu0 %v106
    %655 = vmatprep.subr.mxu0 0.0
    %656 = vmatpush1.msra.mxu0 %v107
    %657 = vmatprep.subr.mxu0 0.0
    %658 = vmatpush1.msra.mxu0 %v108
    %659 = vmatprep.subr.mxu0 0.0
    %660 = vmatpush1.msra.mxu0 %v109
    %661 = vmatprep.subr.mxu0 0.0
    %662 = vmatpush1.msra.mxu0 %v110
    %663 = vmatprep.subr.mxu0 0.0
    %664 = vmatpush1.msra.mxu0 %v111
    %665 = vmatprep.subr.mxu0 0.0
    %666 = vmatpush1.msra.mxu0 %v112
    %667 = vmatprep.subr.mxu0 0.0
    %668 = vmatpush1.msra.mxu0 %v113
    %669 = vmatprep.subr.mxu0 0.0
    %670 = vmatpush1.msra.mxu0 %v114
    %671 = vmatprep.subr.mxu0 0.0
    %672 = vmatpush1.msra.mxu0 %v115
    %673 = vmatprep.subr.mxu0 0.0
    %674 = vmatpush1.msra.mxu0 %v116
    %675 = vmatprep.subr.mxu0 0.0
    %676 = vmatpush1.msra.mxu0 %v117
    %677 = vmatprep.subr.mxu0 0.0
    %678 = vmatpush1.msra.mxu0 %v118
    %679 = vmatprep.subr.mxu0 0.0
    %680 = vmatpush1.msra.mxu0 %v119
    %681 = vmatprep.subr.mxu0 0.0
    %682 = vmatpush1.msra.mxu0 %v120
    %683 = vmatprep.subr.mxu0 0.0
    %684 = vmatpush1.msra.mxu0 %v121
    %685 = vmatprep.subr.mxu0 0.0
    %686 = vmatpush1.msra.mxu0 %v122
    %687 = vmatprep.mubr.f32.mxu0 %v400
    %688 = vmatmul.mubr.f32.gmra.mrb[0].mxu0 %v392
    %v689 = vpop.f32.mrb[0].mxu0
    %v690 = vadd.f32 %v620, %v689
    %v691 = vpop.f32.mrb[0].mxu0
    %692 = vdwg.mxu0
    %693 = vmatprep.subr.mxu0 0.0
    %694 = vmatpush1.msra.mxu0 %v123
    %695 = vmatprep.subr.mxu0 0.0
    %696 = vmatpush1.msra.mxu0 %v124
    %697 = vmatprep.subr.mxu0 0.0
    %698 = vmatpush1.msra.mxu0 %v125
    %699 = vmatprep.subr.mxu0 0.0
    %700 = vmatpush1.msra.mxu0 %v126
    %701 = vmatprep.subr.mxu0 0.0
    %702 = vmatpush1.msra.mxu0 %v127
    %703 = vmatprep.subr.mxu0 0.0
    %704 = vmatpush1.msra.mxu0 %v128
    %705 = vmatprep.subr.mxu0 0.0
    %706 = vmatpush1.msra.mxu0 %v129
    %707 = vmatprep.subr.mxu0 0.0
    %708 = vmatpush1.msra.mxu0 %v130
    %709 = vmatprep.subr.mxu0 0.0
    %710 = vmatpush1.msra.mxu0 %v131
    %711 = vmatprep.subr.mxu0 0.0
    %712 = vmatpush1.msra.mxu0 %v132
    %713 = vmatprep.subr.mxu0 0.0
    %714 = vmatpush1.msra.mxu0 %v133
    %715 = vmatprep.subr.mxu0 0.0
    %716 = vmatpush1.msra.mxu0 %v134
    %717 = vmatprep.subr.mxu0 0.0
    %718 = vmatpush1.msra.mxu0 %v135
    %719 = vmatprep.subr.mxu0 0.0
    %720 = vmatpush1.msra.mxu0 %v136
    %721 = vmatprep.subr.mxu0 0.0
    %722 = vmatpush1.msra.mxu0 %v137
    %723 = vmatprep.subr.mxu0 0.0
    %724 = vmatpush1.msra.mxu0 %v138
    %725 = vmatprep.subr.mxu0 0.0
    %726 = vmatpush1.msra.mxu0 %v139
    %727 = vmatprep.subr.mxu0 0.0
    %728 = vmatpush1.msra.mxu0 %v140
    %729 = vmatprep.subr.mxu0 0.0
    %730 = vmatpush1.msra.mxu0 %v141
    %731 = vmatprep.subr.mxu0 0.0
    %732 = vmatpush1.msra.mxu0 %v142
    %733 = vmatprep.subr.mxu0 0.0
    %734 = vmatpush1.msra.mxu0 %v143
    %735 = vmatprep.subr.mxu0 0.0
    %736 = vmatpush1.msra.mxu0 %v144
    %737 = vmatprep.subr.mxu0 0.0
    %738 = vmatpush1.msra.mxu0 %v145
    %739 = vmatprep.subr.mxu0 0.0
    %740 = vmatpush1.msra.mxu0 %v146
    %741 = vmatprep.subr.mxu0 0.0
    %742 = vmatpush1.msra.mxu0 %v147
    %743 = vmatprep.subr.mxu0 0.0
    %744 = vmatpush1.msra.mxu0 %v148
    %745 = vmatprep.subr.mxu0 0.0
    %746 = vmatpush1.msra.mxu0 %v149
    %747 = vmatprep.subr.mxu0 0.0
    %748 = vmatpush1.msra.mxu0 %v150
    %749 = vmatprep.subr.mxu0 0.0
    %750 = vmatpush1.msra.mxu0 %v151
    %751 = vmatprep.subr.mxu0 0.0
    %752 = vmatpush1.msra.mxu0 %v152
    %753 = vmatprep.subr.mxu0 0.0
    %754 = vmatpush1.msra.mxu0 %v153
    %755 = vmatprep.subr.mxu0 0.0
    %756 = vmatpush1.msra.mxu0 %v154
    %757 = vmatprep.mubr.f32.mxu0 %v401
    %758 = vmatmul.mubr.f32.gmra.mrb[0].mxu0 %v399
    %v759 = vpop.f32.mrb[0].mxu0
    %v760 = vadd.f32 %v690, %v759
    %v761 = vpop.f32.mrb[0].mxu0
    %762 = vdwg.mxu0
    %763 = vmatprep.subr.mxu0 0.0
    %764 = vmatpush1.msra.mxu0 %v155
    %765 = vmatprep.subr.mxu0 0.0
    %766 = vmatpush1.msra.mxu0 %v156
    %767 = vmatprep.subr.mxu0 0.0
    %768 = vmatpush1.msra.mxu0 %v157
    %769 = vmatprep.subr.mxu0 0.0
    %770 = vmatpush1.msra.mxu0 %v158
    %771 = vmatprep.subr.mxu0 0.0
    %772 = vmatpush1.msra.mxu0 %v159
    %773 = vmatprep.subr.mxu0 0.0
    %774 = vmatpush1.msra.mxu0 %v160
    %775 = vmatprep.subr.mxu0 0.0
    %776 = vmatpush1.msra.mxu0 %v161
    %777 = vmatprep.subr.mxu0 0.0
    %778 = vmatpush1.msra.mxu0 %v162
    %779 = vmatprep.subr.mxu0 0.0
    %780 = vmatpush1.msra.mxu0 %v163
    %781 = vmatprep.subr.mxu0 0.0
    %782 = vmatpush1.msra.mxu0 %v164
    %783 = vmatprep.subr.mxu0 0.0
    %784 = vmatpush1.msra.mxu0 %v165
    %785 = vmatprep.subr.mxu0 0.0
    %786 = vmatpush1.msra.mxu0 %v166
    %787 = vmatprep.subr.mxu0 0.0
    %788 = vmatpush1.msra.mxu0 %v167
    %789 = vmatprep.subr.mxu0 0.0
    %790 = vmatpush1.msra.mxu0 %v168
    %791 = vmatprep.subr.mxu0 0.0
    %792 = vmatpush1.msra.mxu0 %v169
    %793 = vmatprep.subr.mxu0 0.0
    %794 = vmatpush1.msra.mxu0 %v170
    %795 = vmatprep.subr.mxu0 0.0
    %796 = vmatpush1.msra.mxu0 %v171
    %797 = vmatprep.subr.mxu0 0.0
    %798 = vmatpush1.msra.mxu0 %v172
    %799 = vmatprep.subr.mxu0 0.0
    %800 = vmatpush1.msra.mxu0 %v173
    %801 = vmatprep.subr.mxu0 0.0
    %802 = vmatpush1.msra.mxu0 %v174
    %803 = vmatprep.subr.mxu0 0.0
    %804 = vmatpush1.msra.mxu0 %v175
    %805 = vmatprep.subr.mxu0 0.0
    %806 = vmatpush1.msra.mxu0 %v176
    %807 = vmatprep.subr.mxu0 0.0
    %808 = vmatpush1.msra.mxu0 %v177
    %809 = vmatprep.subr.mxu0 0.0
    %810 = vmatpush1.msra.mxu0 %v178
    %811 = vmatprep.subr.mxu0 0.0
    %812 = vmatpush1.msra.mxu0 %v179
    %813 = vmatprep.subr.mxu0 0.0
    %814 = vmatpush1.msra.mxu0 %v180
    %815 = vmatprep.subr.mxu0 0.0
    %816 = vmatpush1.msra.mxu0 %v181
    %817 = vmatprep.subr.mxu0 0.0
    %818 = vmatpush1.msra.mxu0 %v182
    %819 = vmatprep.subr.mxu0 0.0
    %820 = vmatpush1.msra.mxu0 %v183
    %821 = vmatprep.subr.mxu0 0.0
    %822 = vmatpush1.msra.mxu0 %v184
    %823 = vmatprep.subr.mxu0 0.0
    %824 = vmatpush1.msra.mxu0 %v185
    %825 = vmatprep.subr.mxu0 0.0
    %826 = vmatpush1.msra.mxu0 %v186
    %827 = vmatprep.mubr.f32.mxu0 %v417
    %828 = vmatmul.mubr.f32.gmra.mrb[0].mxu0 %v409
    %v829 = vpop.f32.mrb[0].mxu0
    %v830 = vadd.f32 %v760, %v829
    %v831 = vpop.f32.mrb[0].mxu0
    %832 = vdwg.mxu0
    %833 = vmatprep.subr.mxu0 0.0
    %834 = vmatpush1.msra.mxu0 %v187
    %835 = vmatprep.subr.mxu0 0.0
    %836 = vmatpush1.msra.mxu0 %v188
    %837 = vmatprep.subr.mxu0 0.0
    %838 = vmatpush1.msra.mxu0 %v189
    %839 = vmatprep.subr.mxu0 0.0
    %840 = vmatpush1.msra.mxu0 %v190
    %841 = vmatprep.subr.mxu0 0.0
    %842 = vmatpush1.msra.mxu0 %v191
    %843 = vmatprep.subr.mxu0 0.0
    %844 = vmatpush1.msra.mxu0 %v192
    %845 = vmatprep.subr.mxu0 0.0
    %846 = vmatpush1.msra.mxu0 %v193
    %847 = vmatprep.subr.mxu0 0.0
    %848 = vmatpush1.msra.mxu0 %v194
    %849 = vmatprep.subr.mxu0 0.0
    %850 = vmatpush1.msra.mxu0 %v195
    %851 = vmatprep.subr.mxu0 0.0
    %852 = vmatpush1.msra.mxu0 %v196
    %853 = vmatprep.subr.mxu0 0.0
    %854 = vmatpush1.msra.mxu0 %v197
    %855 = vmatprep.subr.mxu0 0.0
    %856 = vmatpush1.msra.mxu0 %v198
    %857 = vmatprep.subr.mxu0 0.0
    %858 = vmatpush1.msra.mxu0 %v199
    %859 = vmatprep.subr.mxu0 0.0
    %860 = vmatpush1.msra.mxu0 %v200
    %861 = vmatprep.subr.mxu0 0.0
    %862 = vmatpush1.msra.mxu0 %v201
    %863 = vmatprep.subr.mxu0 0.0
    %864 = vmatpush1.msra.mxu0 %v202
    %865 = vmatprep.subr.mxu0 0.0
    %866 = vmatpush1.msra.mxu0 %v203
    %867 = vmatprep.subr.mxu0 0.0
    %868 = vmatpush1.msra.mxu0 %v204
    %869 = vmatprep.subr.mxu0 0.0
    %870 = vmatpush1.msra.mxu0 %v205
    %871 = vmatprep.subr.mxu0 0.0
    %872 = vmatpush1.msra.mxu0 %v206
    %873 = vmatprep.subr.mxu0 0.0
    %874 = vmatpush1.msra.mxu0 %v207
    %875 = vmatprep.subr.mxu0 0.0
    %876 = vmatpush1.msra.mxu0 %v208
    %877 = vmatprep.subr.mxu0 0.0
    %878 = vmatpush1.msra.mxu0 %v209
    %879 = vmatprep.subr.mxu0 0.0
    %880 = vmatpush1.msra.mxu0 %v210
    %881 = vmatprep.subr.mxu0 0.0
    %882 = vmatpush1.msra.mxu0 %v211
    %883 = vmatprep.subr.mxu0 0.0
    %884 = vmatpush1.msra.mxu0 %v212
    %885 = vmatprep.subr.mxu0 0.0
    %886 = vmatpush1.msra.mxu0 %v213
    %887 = vmatprep.subr.mxu0 0.0
    %888 = vmatpush1.msra.mxu0 %v214
    %889 = vmatprep.subr.mxu0 0.0
    %890 = vmatpush1.msra.mxu0 %v215
    %891 = vmatprep.subr.mxu0 0.0
    %892 = vmatpush1.msra.mxu0 %v216
    %893 = vmatprep.subr.mxu0 0.0
    %894 = vmatpush1.msra.mxu0 %v217
    %895 = vmatprep.subr.mxu0 0.0
    %896 = vmatpush1.msra.mxu0 %v218
    %897 = vmatprep.mubr.f32.mxu0 %v418
    %898 = vmatmul.mubr.f32.gmra.mrb[0].mxu0 %v416
    %v899 = vpop.f32.mrb[0].mxu0
    %v900 = vadd.f32 %v830, %v899
    %v901 = vpop.f32.mrb[0].mxu0
    %902 = vdwg.mxu0
    %903 = vmatprep.subr.mxu0 0.0
    %904 = vmatpush1.msra.mxu0 %v219
    %905 = vmatprep.subr.mxu0 0.0
    %906 = vmatpush1.msra.mxu0 %v220
    %907 = vmatprep.subr.mxu0 0.0
    %908 = vmatpush1.msra.mxu0 %v221
    %909 = vmatprep.subr.mxu0 0.0
    %910 = vmatpush1.msra.mxu0 %v222
    %911 = vmatprep.subr.mxu0 0.0
    %912 = vmatpush1.msra.mxu0 %v223
    %913 = vmatprep.subr.mxu0 0.0
    %914 = vmatpush1.msra.mxu0 %v224
    %915 = vmatprep.subr.mxu0 0.0
    %916 = vmatpush1.msra.mxu0 %v225
    %917 = vmatprep.subr.mxu0 0.0
    %918 = vmatpush1.msra.mxu0 %v226
    %919 = vmatprep.subr.mxu0 0.0
    %920 = vmatpush1.msra.mxu0 %v227
    %921 = vmatprep.subr.mxu0 0.0
    %922 = vmatpush1.msra.mxu0 %v228
    %923 = vmatprep.subr.mxu0 0.0
    %924 = vmatpush1.msra.mxu0 %v229
    %925 = vmatprep.subr.mxu0 0.0
    %926 = vmatpush1.msra.mxu0 %v230
    %927 = vmatprep.subr.mxu0 0.0
    %928 = vmatpush1.msra.mxu0 %v231
    %929 = vmatprep.subr.mxu0 0.0
    %930 = vmatpush1.msra.mxu0 %v232
    %931 = vmatprep.subr.mxu0 0.0
    %932 = vmatpush1.msra.mxu0 %v233
    %933 = vmatprep.subr.mxu0 0.0
    %934 = vmatpush1.msra.mxu0 %v234
    %935 = vmatprep.subr.mxu0 0.0
    %936 = vmatpush1.msra.mxu0 %v235
    %937 = vmatprep.subr.mxu0 0.0
    %938 = vmatpush1.msra.mxu0 %v236
    %939 = vmatprep.subr.mxu0 0.0
    %940 = vmatpush1.msra.mxu0 %v237
    %941 = vmatprep.subr.mxu0 0.0
    %942 = vmatpush1.msra.mxu0 %v238
    %943 = vmatprep.subr.mxu0 0.0
    %944 = vmatpush1.msra.mxu0 %v239
    %945 = vmatprep.subr.mxu0 0.0
    %946 = vmatpush1.msra.mxu0 %v240
    %947 = vmatprep.subr.mxu0 0.0
    %948 = vmatpush1.msra.mxu0 %v241
    %949 = vmatprep.subr.mxu0 0.0
    %950 = vmatpush1.msra.mxu0 %v242
    %951 = vmatprep.subr.mxu0 0.0
    %952 = vmatpush1.msra.mxu0 %v243
    %953 = vmatprep.subr.mxu0 0.0
    %954 = vmatpush1.msra.mxu0 %v244
    %955 = vmatprep.subr.mxu0 0.0
    %956 = vmatpush1.msra.mxu0 %v245
    %957 = vmatprep.subr.mxu0 0.0
    %958 = vmatpush1.msra.mxu0 %v246
    %959 = vmatprep.subr.mxu0 0.0
    %960 = vmatpush1.msra.mxu0 %v247
    %961 = vmatprep.subr.mxu0 0.0
    %962 = vmatpush1.msra.mxu0 %v248
    %963 = vmatprep.subr.mxu0 0.0
    %964 = vmatpush1.msra.mxu0 %v249
    %965 = vmatprep.subr.mxu0 0.0
    %966 = vmatpush1.msra.mxu0 %v250
    %967 = vmatprep.mubr.f32.mxu0 %v434
    %968 = vmatmul.mubr.f32.gmra.mrb[0].mxu0 %v426
    %v969 = vpop.f32.mrb[0].mxu0
    %v970 = vadd.f32 %v900, %v969
    %v971 = vpop.f32.mrb[0].mxu0
    %972 = vdwg.mxu0
    %973 = vmatprep.subr.mxu0 0.0
    %974 = vmatpush1.msra.mxu0 %v251
    %975 = vmatprep.subr.mxu0 0.0
    %976 = vmatpush1.msra.mxu0 %v252
    %977 = vmatprep.subr.mxu0 0.0
    %978 = vmatpush1.msra.mxu0 %v253
    %979 = vmatprep.subr.mxu0 0.0
    %980 = vmatpush1.msra.mxu0 %v254
    %981 = vmatprep.subr.mxu0 0.0
    %982 = vmatpush1.msra.mxu0 %v255
    %983 = vmatprep.subr.mxu0 0.0
    %984 = vmatpush1.msra.mxu0 %v256
    %985 = vmatprep.subr.mxu0 0.0
    %986 = vmatpush1.msra.mxu0 %v257
    %987 = vmatprep.subr.mxu0 0.0
    %988 = vmatpush1.msra.mxu0 %v258
    %989 = vmatprep.subr.mxu0 0.0
    %990 = vmatpush1.msra.mxu0 %v259
    %991 = vmatprep.subr.mxu0 0.0
    %992 = vmatpush1.msra.mxu0 %v260
    %993 = vmatprep.subr.mxu0 0.0
    %994 = vmatpush1.msra.mxu0 %v261
    %995 = vmatprep.subr.mxu0 0.0
    %996 = vmatpush1.msra.mxu0 %v262
    %997 = vmatprep.subr.mxu0 0.0
    %998 = vmatpush1.msra.mxu0 %v263
    %999 = vmatprep.subr.mxu0 0.0
    %1000 = vmatpush1.msra.mxu0 %v264
    %1001 = vmatprep.subr.mxu0 0.0
    %1002 = vmatpush1.msra.mxu0 %v265
    %1003 = vmatprep.subr.mxu0 0.0
    %1004 = vmatpush1.msra.mxu0 %v266
    %1005 = vmatprep.subr.mxu0 0.0
    %1006 = vmatpush1.msra.mxu0 %v267
    %1007 = vmatprep.subr.mxu0 0.0
    %1008 = vmatpush1.msra.mxu0 %v268
    %1009 = vmatprep.subr.mxu0 0.0
    %1010 = vmatpush1.msra.mxu0 %v269
    %1011 = vmatprep.subr.mxu0 0.0
    %1012 = vmatpush1.msra.mxu0 %v270
    %1013 = vmatprep.subr.mxu0 0.0
    %1014 = vmatpush1.msra.mxu0 %v271
    %1015 = vmatprep.subr.mxu0 0.0
    %1016 = vmatpush1.msra.mxu0 %v272
    %1017 = vmatprep.subr.mxu0 0.0
    %1018 = vmatpush1.msra.mxu0 %v273
    %1019 = vmatprep.subr.mxu0 0.0
    %1020 = vmatpush1.msra.mxu0 %v274
    %1021 = vmatprep.subr.mxu0 0.0
    %1022 = vmatpush1.msra.mxu0 %v275
    %1023 = vmatprep.subr.mxu0 0.0
    %1024 = vmatpush1.msra.mxu0 %v276
    %1025 = vmatprep.subr.mxu0 0.0
    %1026 = vmatpush1.msra.mxu0 %v277
    %1027 = vmatprep.subr.mxu0 0.0
    %1028 = vmatpush1.msra.mxu0 %v278
    %1029 = vmatprep.subr.mxu0 0.0
    %1030 = vmatpush1.msra.mxu0 %v279
    %1031 = vmatprep.subr.mxu0 0.0
    %1032 = vmatpush1.msra.mxu0 %v280
    %1033 = vmatprep.subr.mxu0 0.0
    %1034 = vmatpush1.msra.mxu0 %v281
    %1035 = vmatprep.subr.mxu0 0.0
    %1036 = vmatpush1.msra.mxu0 %v282
    %1037 = vmatprep.mubr.f32.mxu0 %v435
    %1038 = vmatmul.mubr.f32.gmra.mrb[0].mxu0 %v433
    %v1039 = vpop.f32.mrb[0].mxu0
    %v1040 = vadd.f32 %v970, %v1039
    %v1041 = vpop.f32.mrb[0].mxu0
    %1042 = vdwg.mxu0
    %1043 = vmatprep.subr.mxu0 0.0
    %1044 = vmatpush1.msra.mxu0 %v283
    %1045 = vmatprep.subr.mxu0 0.0
    %1046 = vmatpush1.msra.mxu0 %v284
    %1047 = vmatprep.subr.mxu0 0.0
    %1048 = vmatpush1.msra.mxu0 %v285
    %1049 = vmatprep.subr.mxu0 0.0
    %1050 = vmatpush1.msra.mxu0 %v286
    %1051 = vmatprep.subr.mxu0 0.0
    %1052 = vmatpush1.msra.mxu0 %v287
    %1053 = vmatprep.subr.mxu0 0.0
    %1054 = vmatpush1.msra.mxu0 %v288
    %1055 = vmatprep.subr.mxu0 0.0
    %1056 = vmatpush1.msra.mxu0 %v289
    %1057 = vmatprep.subr.mxu0 0.0
    %1058 = vmatpush1.msra.mxu0 %v290
    %1059 = vmatprep.subr.mxu0 0.0
    %1060 = vmatpush1.msra.mxu0 %v291
    %1061 = vmatprep.subr.mxu0 0.0
    %1062 = vmatpush1.msra.mxu0 %v292
    %1063 = vmatprep.subr.mxu0 0.0
    %1064 = vmatpush1.msra.mxu0 %v293
    %1065 = vmatprep.subr.mxu0 0.0
    %1066 = vmatpush1.msra.mxu0 %v294
    %1067 = vmatprep.subr.mxu0 0.0
    %1068 = vmatpush1.msra.mxu0 %v295
    %1069 = vmatprep.subr.mxu0 0.0
    %1070 = vmatpush1.msra.mxu0 %v296
    %1071 = vmatprep.subr.mxu0 0.0
    %1072 = vmatpush1.msra.mxu0 %v297
    %1073 = vmatprep.subr.mxu0 0.0
    %1074 = vmatpush1.msra.mxu0 %v298
    %1075 = vmatprep.subr.mxu0 0.0
    %1076 = vmatpush1.msra.mxu0 %v299
    %1077 = vmatprep.subr.mxu0 0.0
    %1078 = vmatpush1.msra.mxu0 %v300
    %1079 = vmatprep.subr.mxu0 0.0
    %1080 = vmatpush1.msra.mxu0 %v301
    %1081 = vmatprep.subr.mxu0 0.0
    %1082 = vmatpush1.msra.mxu0 %v302
    %1083 = vmatprep.subr.mxu0 0.0
    %1084 = vmatpush1.msra.mxu0 %v303
    %1085 = vmatprep.subr.mxu0 0.0
    %1086 = vmatpush1.msra.mxu0 %v304
    %1087 = vmatprep.subr.mxu0 0.0
    %1088 = vmatpush1.msra.mxu0 %v305
    %1089 = vmatprep.subr.mxu0 0.0
    %1090 = vmatpush1.msra.mxu0 %v306
    %1091 = vmatprep.subr.mxu0 0.0
    %1092 = vmatpush1.msra.mxu0 %v307
    %1093 = vmatprep.subr.mxu0 0.0
    %1094 = vmatpush1.msra.mxu0 %v308
    %1095 = vmatprep.subr.mxu0 0.0
    %1096 = vmatpush1.msra.mxu0 %v309
    %1097 = vmatprep.subr.mxu0 0.0
    %1098 = vmatpush1.msra.mxu0 %v310
    %1099 = vmatprep.subr.mxu0 0.0
    %1100 = vmatpush1.msra.mxu0 %v311
    %1101 = vmatprep.subr.mxu0 0.0
    %1102 = vmatpush1.msra.mxu0 %v312
    %1103 = vmatprep.subr.mxu0 0.0
    %1104 = vmatpush1.msra.mxu0 %v313
    %1105 = vmatprep.subr.mxu0 0.0
    %1106 = vmatpush1.msra.mxu0 %v314
    %1107 = vmatprep.mubr.f32.mxu0 %v451
    %1108 = vmatmul.mubr.f32.gmra.mrb[0].mxu0 %v443
    %v1109 = vpop.f32.mrb[0].mxu0
    %v1110 = vadd.f32 %v1040, %v1109
    %v1111 = vpop.f32.mrb[0].mxu0
    %1112 = vdwg.mxu0
    %1113 = vmatprep.subr.mxu0 0.0
    %1114 = vmatpush1.msra.mxu0 %v315
    %1115 = vmatprep.subr.mxu0 0.0
    %1116 = vmatpush1.msra.mxu0 %v316
    %1117 = vmatprep.subr.mxu0 0.0
    %1118 = vmatpush1.msra.mxu0 %v317
    %1119 = vmatprep.subr.mxu0 0.0
    %1120 = vmatpush1.msra.mxu0 %v318
    %1121 = vmatprep.subr.mxu0 0.0
    %1122 = vmatpush1.msra.mxu0 %v319
    %1123 = vmatprep.subr.mxu0 0.0
    %1124 = vmatpush1.msra.mxu0 %v320
    %1125 = vmatprep.subr.mxu0 0.0
    %1126 = vmatpush1.msra.mxu0 %v321
    %1127 = vmatprep.subr.mxu0 0.0
    %1128 = vmatpush1.msra.mxu0 %v322
    %1129 = vmatprep.subr.mxu0 0.0
    %1130 = vmatpush1.msra.mxu0 %v323
    %1131 = vmatprep.subr.mxu0 0.0
    %1132 = vmatpush1.msra.mxu0 %v324
    %1133 = vmatprep.subr.mxu0 0.0
    %1134 = vmatpush1.msra.mxu0 %v325
    %1135 = vmatprep.subr.mxu0 0.0
    %1136 = vmatpush1.msra.mxu0 %v326
    %1137 = vmatprep.subr.mxu0 0.0
    %1138 = vmatpush1.msra.mxu0 %v327
    %1139 = vmatprep.subr.mxu0 0.0
    %1140 = vmatpush1.msra.mxu0 %v328
    %1141 = vmatprep.subr.mxu0 0.0
    %1142 = vmatpush1.msra.mxu0 %v329
    %1143 = vmatprep.subr.mxu0 0.0
    %1144 = vmatpush1.msra.mxu0 %v330
    %1145 = vmatprep.subr.mxu0 0.0
    %1146 = vmatpush1.msra.mxu0 %v331
    %1147 = vmatprep.subr.mxu0 0.0
    %1148 = vmatpush1.msra.mxu0 %v332
    %1149 = vmatprep.subr.mxu0 0.0
    %1150 = vmatpush1.msra.mxu0 %v333
    %1151 = vmatprep.subr.mxu0 0.0
    %1152 = vmatpush1.msra.mxu0 %v334
    %1153 = vmatprep.subr.mxu0 0.0
    %1154 = vmatpush1.msra.mxu0 %v335
    %1155 = vmatprep.subr.mxu0 0.0
    %1156 = vmatpush1.msra.mxu0 %v336
    %1157 = vmatprep.subr.mxu0 0.0
    %1158 = vmatpush1.msra.mxu0 %v337
    %1159 = vmatprep.subr.mxu0 0.0
    %1160 = vmatpush1.msra.mxu0 %v338
    %1161 = vmatprep.subr.mxu0 0.0
    %1162 = vmatpush1.msra.mxu0 %v339
    %1163 = vmatprep.subr.mxu0 0.0
    %1164 = vmatpush1.msra.mxu0 %v340
    %1165 = vmatprep.subr.mxu0 0.0
    %1166 = vmatpush1.msra.mxu0 %v341
    %1167 = vmatprep.subr.mxu0 0.0
    %1168 = vmatpush1.msra.mxu0 %v342
    %1169 = vmatprep.subr.mxu0 0.0
    %1170 = vmatpush1.msra.mxu0 %v343
    %1171 = vmatprep.subr.mxu0 0.0
    %1172 = vmatpush1.msra.mxu0 %v344
    %1173 = vmatprep.subr.mxu0 0.0
    %1174 = vmatpush1.msra.mxu0 %v345
    %1175 = vmatprep.subr.mxu0 0.0
    %1176 = vmatpush1.msra.mxu0 %v346
    %1177 = vmatprep.mubr.f32.mxu0 %v452
    %1178 = vmatmul.mubr.f32.gmra.mrb[0].mxu0 %v450
    %v1179 = vpop.f32.mrb[0].mxu0
    %v1180 = vadd.f32 %v1110, %v1179
    %v1181 = vpop.f32.mrb[0].mxu0
    %1182 = vdwg.mxu0
    %1183 = vmatprep.subr.mxu0 0.0
    %1184 = vmatpush1.msra.mxu0 %v347
    %1185 = vmatprep.subr.mxu0 0.0
    %1186 = vmatpush1.msra.mxu0 %v348
    %1187 = vmatprep.subr.mxu0 0.0
    %1188 = vmatpush1.msra.mxu0 %v349
    %1189 = vmatprep.subr.mxu0 0.0
    %1190 = vmatpush1.msra.mxu0 %v350
    %1191 = vmatprep.subr.mxu0 0.0
    %1192 = vmatpush1.msra.mxu0 %v351
    %1193 = vmatprep.subr.mxu0 0.0
    %1194 = vmatpush1.msra.mxu0 %v352
    %1195 = vmatprep.subr.mxu0 0.0
    %1196 = vmatpush1.msra.mxu0 %v353
    %1197 = vmatprep.subr.mxu0 0.0
    %1198 = vmatpush1.msra.mxu0 %v354
    %1199 = vmatprep.subr.mxu0 0.0
    %1200 = vmatpush1.msra.mxu0 0.0
    %1201 = vmatprep.subr.mxu0 0.0
    %1202 = vmatpush1.msra.mxu0 0.0
    %1203 = vmatprep.subr.mxu0 0.0
    %1204 = vmatpush1.msra.mxu0 0.0
    %1205 = vmatprep.subr.mxu0 0.0
    %1206 = vmatpush1.msra.mxu0 0.0
    %1207 = vmatprep.subr.mxu0 0.0
    %1208 = vmatpush1.msra.mxu0 0.0
    %1209 = vmatprep.subr.mxu0 0.0
    %1210 = vmatpush1.msra.mxu0 0.0
    %1211 = vmatprep.subr.mxu0 0.0
    %1212 = vmatpush1.msra.mxu0 0.0
    %1213 = vmatprep.subr.mxu0 0.0
    %1214 = vmatpush1.msra.mxu0 0.0
    %1215 = vmatprep.subr.mxu0 0.0
    %1216 = vmatpush1.msra.mxu0 0.0
    %1217 = vmatprep.subr.mxu0 0.0
    %1218 = vmatpush1.msra.mxu0 0.0
    %1219 = vmatprep.subr.mxu0 0.0
    %1220 = vmatpush1.msra.mxu0 0.0
    %1221 = vmatprep.subr.mxu0 0.0
    %1222 = vmatpush1.msra.mxu0 0.0
    %1223 = vmatprep.subr.mxu0 0.0
    %1224 = vmatpush1.msra.mxu0 0.0
    %1225 = vmatprep.subr.mxu0 0.0
    %1226 = vmatpush1.msra.mxu0 0.0
    %1227 = vmatprep.subr.mxu0 0.0
    %1228 = vmatpush1.msra.mxu0 0.0
    %1229 = vmatprep.subr.mxu0 0.0
    %1230 = vmatpush1.msra.mxu0 0.0
    %1231 = vmatprep.subr.mxu0 0.0
    %1232 = vmatpush1.msra.mxu0 0.0
    %1233 = vmatprep.subr.mxu0 0.0
    %1234 = vmatpush1.msra.mxu0 0.0
    %1235 = vmatprep.subr.mxu0 0.0
    %1236 = vmatpush1.msra.mxu0 0.0
    %1237 = vmatprep.subr.mxu0 0.0
    %1238 = vmatpush1.msra.mxu0 0.0
    %1239 = vmatprep.subr.mxu0 0.0
    %1240 = vmatpush1.msra.mxu0 0.0
    %1241 = vmatprep.subr.mxu0 0.0
    %1242 = vmatpush1.msra.mxu0 0.0
    %1243 = vmatprep.subr.mxu0 0.0
    %1244 = vmatpush1.msra.mxu0 0.0
    %1245 = vmatprep.subr.mxu0 0.0
    %1246 = vmatpush1.msra.mxu0 0.0
    %1247 = vmatprep.mubr.f32.mxu0 0.0
    %1248 = vmatmul.mubr.f32.gmra.mrb[0].mxu0 %v481
    %v1249 = vpop.f32.mrb[0].mxu0
    %v1250 = vadd.f32 %v1180, %v1249
    %v1251 = vpop.f32.mrb[0].mxu0
    %1252 = vdwg.mxu0
    %v1253 = vmax.f32 %v1250, 0.0
    %v1254 = vld [vmem:[%s3] sm:$0xff]
    %v1255 = vld [vmem:[%s3 + $0x8] sm:$0xff]
    %v1256 = vld [vmem:[%s3 + $0x10] sm:$0xff]
    %v1257 = vld [vmem:[%s3 + $0x18] sm:$0xff]
    %v1258 = vld [vmem:[%s3 + $0x20] sm:$0xff]
    %v1259 = vld [vmem:[%s3 + $0x28] sm:$0xff]
    %v1260 = vld [vmem:[%s3 + $0x30] sm:$0xff]
    %v1261 = vld [vmem:[%s3 + $0x38] sm:$0xff]
    %v1262 = vld [vmem:[%s4] sm:$0x1]
    %v1264 = vlaneseq
    %v1265 = vshrl.u32 %v1264, 7
    %v1266 = vsub.s32 0, %v1265
    %v1267 = vrot.slane %v1262, %v1266
    %v1270 = vsel %vm480, %v1253, 0
    %1272 = vmatprep.subr.mxu0 0.0
    %1273 = vmatpush1.msra.mxu0 %v1254
    %1274 = vmatprep.subr.mxu0 0.0
    %1275 = vmatpush1.msra.mxu0 %v1255
    %1276 = vmatprep.subr.mxu0 0.0
    %1277 = vmatpush1.msra.mxu0 %v1256
    %1278 = vmatprep.subr.mxu0 0.0
    %1279 = vmatpush1.msra.mxu0 %v1257
    %1280 = vmatprep.subr.mxu0 0.0
    %1281 = vmatpush1.msra.mxu0 %v1258
    %1282 = vmatprep.subr.mxu0 0.0
    %1283 = vmatpush1.msra.mxu0 %v1259
    %1284 = vmatprep.subr.mxu0 0.0
    %1285 = vmatpush1.msra.mxu0 %v1260
    %1286 = vmatprep.subr.mxu0 0.0
    %1287 = vmatpush1.msra.mxu0 %v1261
    %1288 = vmatprep.subr.mxu0 0.0
    %1289 = vmatpush1.msra.mxu0 0.0
    %1290 = vmatprep.subr.mxu0 0.0
    %1291 = vmatpush1.msra.mxu0 0.0
    %1292 = vmatprep.subr.mxu0 0.0
    %1293 = vmatpush1.msra.mxu0 0.0
    %1294 = vmatprep.subr.mxu0 0.0
    %1295 = vmatpush1.msra.mxu0 0.0
    %1296 = vmatprep.subr.mxu0 0.0
    %1297 = vmatpush1.msra.mxu0 0.0
    %1298 = vmatprep.subr.mxu0 0.0
    %1299 = vmatpush1.msra.mxu0 0.0
    %1300 = vmatprep.subr.mxu0 0.0
    %1301 = vmatpush1.msra.mxu0 0.0
    %1302 = vmatprep.subr.mxu0 0.0
    %1303 = vmatpush1.msra.mxu0 0.0
    %1304 = vmatprep.subr.mxu0 0.0
    %1305 = vmatpush1.msra.mxu0 0.0
    %1306 = vmatprep.subr.mxu0 0.0
    %1307 = vmatpush1.msra.mxu0 0.0
    %1308 = vmatprep.subr.mxu0 0.0
    %1309 = vmatpush1.msra.mxu0 0.0
    %1310 = vmatprep.subr.mxu0 0.0
    %1311 = vmatpush1.msra.mxu0 0.0
    %1312 = vmatprep.subr.mxu0 0.0
    %1313 = vmatpush1.msra.mxu0 0.0
    %1314 = vmatprep.subr.mxu0 0.0
    %1315 = vmatpush1.msra.mxu0 0.0
    %1316 = vmatprep.subr.mxu0 0.0
    %1317 = vmatpush1.msra.mxu0 0.0
    %1318 = vmatprep.subr.mxu0 0.0
    %1319 = vmatpush1.msra.mxu0 0.0
    %1320 = vmatprep.subr.mxu0 0.0
    %1321 = vmatpush1.msra.mxu0 0.0
    %1322 = vmatprep.subr.mxu0 0.0
    %1323 = vmatpush1.msra.mxu0 0.0
    %1324 = vmatprep.subr.mxu0 0.0
    %1325 = vmatpush1.msra.mxu0 0.0
    %1326 = vmatprep.subr.mxu0 0.0
    %1327 = vmatpush1.msra.mxu0 0.0
    %1328 = vmatprep.subr.mxu0 0.0
    %1329 = vmatpush1.msra.mxu0 0.0
    %1330 = vmatprep.subr.mxu0 0.0
    %1331 = vmatpush1.msra.mxu0 0.0
    %1332 = vmatprep.subr.mxu0 0.0
    %1333 = vmatpush1.msra.mxu0 0.0
    %1334 = vmatprep.subr.mxu0 0.0
    %1335 = vmatpush1.msra.mxu0 0.0
    %1336 = vmatprep.mubr.f32.mxu0 0.0
    %1337 = vmatmul.mubr.f32.gmra.mrb[0].mxu0 %v1270
    %v1338 = vpop.f32.mrb[0].mxu0
    %v1339 = vadd.f32 %v1267, %v1338
    %v1340 = vpop.f32.mrb[0].mxu0
    %1341 = vdwg.mxu0
    %vm1342 = vcmask 17408
    %1343 = vst.msk [vmem:[#allocation2] sm:$0x3] %vm1342, %v1339
    // Predicated region
    $region22: #{classifier_forward.3} parent=1 // pred_check
      _
    $region23: #{classifier_forward.3} parent=1 // pred_check_branch
      %1345 = sbr.rel (0) target = $region25
    $region24: #{classifier_forward.3} parent=1 // pred_region
      %s1347 = ssub.s32 32, 32
      %1348 = vsyncadd [#allocation3], %s1347
      %s1350 = sshll.u32 [#allocation2], 4
      %s1351 = int_to_ptr.vmem [resolvable:$true] %s1350
      %1353 = dma.vmem_to_hbm [thread:$0]  %s1351, 32, %s5, [#allocation3]
    $region25: #{classifier_forward.3} parent=1 // pred_fallthru
      _
    // Predicated region
    $region26: #{classifier_forward.3} parent=1 // pred_check
      _
    $region27: #{classifier_forward.3} parent=1 // pred_check_branch
      %1355 = sbr.rel (0) target = $region29
    $region28: #{classifier_forward.3} parent=1 // pred_region
      %1356 = dma.done [#allocation3], 32
    $region29: #{classifier_forward.3} parent=1 // pred_fallthru
      _
    %1357 = vsyncpa [#allocation3], 1

</llo_original>
